<compile_context>
chip_gen: v7x
topology: tpu7x:2x2x1
jax: 0.10.0
libtpu: 0.0.40
codegen_flags: <defaults>
</compile_context>

<pallas_src>
import functools
from types import SimpleNamespace

import jax
import jax.numpy as jnp
from jax.experimental import pallas as pl
from jax.experimental.pallas import tpu as pltpu


# ----------------------------------------------------------------------------
# Pallas kernel 1: M-collapsed matmul + bias (1x1 conv over flattened tokens)
# ----------------------------------------------------------------------------
def _matmul_bias_kernel(x_ref, w_ref, b_ref, o_ref):
    # x_ref: (TM, K) f32, w_ref: (K, D) bf16, b_ref: (1, D) f32, o_ref: (TM, D) f32
    acc = jnp.dot(x_ref[...].astype(jnp.bfloat16), w_ref[...],
                  preferred_element_type=jnp.float32)
    o_ref[...] = acc + b_ref[...]          # bias add stays in f32 (v5e-friendly)


def pallas_matmul_bias(x2d, w, b, *, tile_m=512):
    """x2d: (M, K) f32 (M = batch*spatial collapsed), w: (K, D) f32, b: (D,) f32
    -> (M, D) f32.  bf16 MXU operands, f32 accumulation, weight stays resident."""
    M, K = x2d.shape
    D = w.shape[1]
    tm = M if M <= tile_m else tile_m                    # full-M block when small
    grid_m = pl.cdiv(M, tm)
    Mp = grid_m * tm
    if Mp != M:
        x2d = jnp.pad(x2d, ((0, Mp - M), (0, 0)))
    out = pl.pallas_call(
        _matmul_bias_kernel,
        out_shape=jax.ShapeDtypeStruct((Mp, D), jnp.float32),
        grid=(grid_m,),
        in_specs=[
            pl.BlockSpec((tm, K), lambda i: (i, 0)),
            pl.BlockSpec((K, D), lambda i: (0, 0)),      # weight block invariant
            pl.BlockSpec((1, D), lambda i: (0, 0)),
        ],
        out_specs=pl.BlockSpec((tm, D), lambda i: (i, 0)),
        compiler_params=pltpu.CompilerParams(dimension_semantics=("parallel",)),
    )(x2d, w.astype(jnp.bfloat16), b.reshape(1, D))
    return out[:M]


# ----------------------------------------------------------------------------
# Pallas kernel 2: fused linear_vs + linear_tx + WeakREChead eval path
# ----------------------------------------------------------------------------
def _head_fused_kernel(vis_ref, txt_ref, vsw_ref, vsb_ref, txw_ref, txb_ref,
                       sim_ref, pred_ref, *, batch, select):
    # vis_ref: (B*S, 1024) f32, txt_ref: (B, H) f32
    # vsw_ref: (1024, H) bf16, vsb_ref: (1, H) f32
    # txw_ref: (H, H) bf16,   txb_ref: (1, H) f32
    # sim_ref/pred_ref: (B, S)
    lin_v = jnp.dot(vis_ref[...].astype(jnp.bfloat16), vsw_ref[...],
                    preferred_element_type=jnp.float32) + vsb_ref[...]     # (B*S, H)
    lin_t = jnp.dot(txt_ref[...].astype(jnp.bfloat16), txw_ref[...],
                    preferred_element_type=jnp.float32) + txb_ref[...]     # (B, H)

    # L2 normalize in f32 (rsqrt goes to EUP; no bf16 VPU dependence -> v5e safe)
    v_n = lin_v * jax.lax.rsqrt(jnp.sum(lin_v * lin_v, axis=-1, keepdims=True) + 1e-12)
    t_n = lin_t * jax.lax.rsqrt(jnp.sum(lin_t * lin_t, axis=-1, keepdims=True) + 1e-12)

    # per-batch cosine similarity (layout-preserving reshape: last dim unchanged)
    v3 = v_n.reshape(batch, select, v_n.shape[-1])                          # (B, S, H)
    sim = jnp.sum(v3 * t_n[:, None, :], axis=-1)                            # (B, S)

    # single-hot prediction: argmax with first-index tie-break (torch.argmax semantics)
    cols = jax.lax.broadcasted_iota(jnp.int32, (batch, select), 1)
    best_val = jnp.max(sim, axis=-1, keepdims=True)                         # (B, 1)
    best_idx = jnp.min(jnp.where(sim >= best_val, cols, select),
                       axis=-1, keepdims=True)                              # (B, 1)

    sim_ref[...] = sim
    pred_ref[...] = (cols == best_idx).astype(jnp.int32)


def pallas_head_fused(vis, txt, vs_w, vs_b, tx_w, tx_b):
    """Fused linear_vs -> linear_tx -> cosine-sim -> argmax one-hot.
    vis: (B, S, 1024) f32, txt: (B, H) f32 -> (sim (B,S) f32, pred (B,S) bool)."""
    B, S, K = vis.shape
    H = vs_w.shape[1]
    sim, pred = pl.pallas_call(
        functools.partial(_head_fused_kernel, batch=B, select=S),
        out_shape=(
            jax.ShapeDtypeStruct((B, S), jnp.float32),
            jax.ShapeDtypeStruct((B, S), jnp.int32),
        ),
    )(
        vis.reshape(B * S, K),                   # collapse batch into M (sublanes)
        txt,
        vs_w.astype(jnp.bfloat16), vs_b.reshape(1, H).astype(jnp.float32),
        tx_w.astype(jnp.bfloat16), tx_b.reshape(1, H).astype(jnp.float32),
    )
    return sim, pred.astype(jnp.bool_)


# ----------------------------------------------------------------------------
# Deterministic parameters + stand-in encoders (glue, plain JAX)
# ----------------------------------------------------------------------------
def init_params(key, cfg):
    ks = jax.random.split(key, 10)

    def w(k, shape, scale=None):
        scale = scale if scale is not None else 1.0 / jnp.sqrt(shape[0])
        return jax.random.normal(k, shape, jnp.float32) * scale

    chal = 5 + cfg.class_num
    return {
        # visual_encoder stand-in channel projections (3 -> 256 / 512 / 1024)
        "enc_l": w(ks[0], (3, 256)),
        "enc_m": w(ks[1], (3, 512)),
        "enc_s": w(ks[2], (3, 1024)),
        # YOLO-style box-branch stand-in for boxes_sml[0]
        "box_w": w(ks[3], (256, 3 * chal)),
        # MultiScaleFusion stand-in 1x1-conv projections to hiden_planes=1024
        "fuse_l_w": w(ks[4], (256, 1024)), "fuse_l_b": jnp.zeros((1024,), jnp.float32),
        "fuse_m_w": w(ks[5], (512, 1024)), "fuse_m_b": jnp.zeros((1024,), jnp.float32),
        "fuse_s_w": w(ks[6], (1024, 1024)), "fuse_s_b": jnp.zeros((1024,), jnp.float32),
        # linear_vs = nn.Linear(1024, hidden), linear_tx = nn.Linear(hidden, hidden)
        "vs_w": w(ks[7], (1024, cfg.hidden_size)),
        "vs_b": jnp.zeros((cfg.hidden_size,), jnp.float32),
        "tx_w": w(ks[8], (cfg.hidden_size, cfg.hidden_size)),
        "tx_b": jnp.zeros((cfg.hidden_size,), jnp.float32),
        # TextEncoder stand-in embedding table
        "emb": w(ks[9], (cfg.vocab_size, cfg.hidden_size), 0.1),
    }


def _avg_pool_to(x_nchw, hw):
    B, C, H, W = x_nchw.shape
    f = H // hw
    return x_nchw.reshape(B, C, hw, f, hw, f).mean(axis=(3, 5))


def visual_encoder_standin(params, image_nchw, cfg):
    # TODO(synk): the real visual_encoder (YOLO backbone) is not defined in the
    # provided snippet; this deterministic stand-in only reproduces output shapes.
    def proj(x_nchw, w):
        B, C, H, W = x_nchw.shape
        flat = x_nchw.reshape(B, C, H * W).transpose(0, 2, 1)       # (B, HW, C)
        y = jnp.tanh(flat @ w)                                       # (B, HW, C_out)
        return y.transpose(0, 2, 1).reshape(B, w.shape[1], H, W)

    large_out = proj(_avg_pool_to(image_nchw, 8), params["enc_l"])   # (B, 256, 8, 8)
    middle_out = proj(_avg_pool_to(image_nchw, 4), params["enc_m"])  # (B, 512, 4, 4)
    small_out = proj(_avg_pool_to(image_nchw, 2), params["enc_s"])   # (B, 1024, 2, 2)

    B = image_nchw.shape[0]
    chal = 5 + cfg.class_num
    lf = large_out.reshape(B, 256, 64).transpose(0, 2, 1)            # (B, 64, 256)
    boxes0 = jax.nn.sigmoid(lf @ params["box_w"]).reshape(B, 64, 3, chal)

    output = (small_out, middle_out, large_out)
    boxes_sml = [boxes0]
    return None, output, boxes_sml


def text_encoder_standin(params, text_tokens):
    # TODO(synk): real TextEncoder (LSTM/BERT) not defined in snippet; embedding + mean-pool stand-in.
    emb = params["emb"][text_tokens]         # (B, T, hidden)
    return emb.mean(axis=1)                   # (B, hidden)


def multi_scale_fusion(params, feature_input):
    # TODO(synk): real MultiScaleFusion (up/down-sample + concat convs) is not defined in the
    # snippet; stand-in projects every scale to hiden_planes=1024 with a 1x1-conv matmul.
    # Only the LARGE scale is consumed downstream, so it goes through the Pallas kernel
    # with batch+spatial collapsed into M; the other two scales are kept for dataflow
    # parity only (plain XLA — DCE'd under jit since this forward never reads them).
    large, middle, small = feature_input      # NCHW

    def to_tokens(x_nchw):
        B, C, H, W = x_nchw.shape
        return x_nchw.reshape(B, C, H * W).transpose(0, 2, 1)        # (B, HW, C) channel-last

    lf = to_tokens(large)                                            # (B, 64, 256)
    B, G, C = lf.shape
    new_large_tok = pallas_matmul_bias(
        lf.reshape(B * G, C), params["fuse_l_w"], params["fuse_l_b"]
    ).reshape(B, G, -1)                                              # (B, 64, 1024) channel-last

    mf = to_tokens(middle)
    sf = to_tokens(small)
    new_middle_tok = mf @ params["fuse_m_w"] + params["fuse_m_b"]    # unused downstream
    new_small_tok = sf @ params["fuse_s_w"] + params["fuse_s_b"]     # unused downstream
    return new_large_tok, new_middle_tok, new_small_tok


# ----------------------------------------------------------------------------
# PigDetector forward (eval path)
# ----------------------------------------------------------------------------
def pig_detector_forward(params, cfg, image_input, text_input):
    _, output, boxes_sml = visual_encoder_standin(params, image_input, cfg)
    text_features = text_encoder_standin(params, text_input)

    small_out, middle_out, large_out = output
    feature_input = [large_out, middle_out, small_out]
    new_large_tok, _, _ = multi_scale_fusion(params, feature_input)   # (B, G, 1024) channel-last

    boxes0 = boxes_sml[0]                                             # (B, G, A, C)
    batch_size, grid_num, anchor_num, chal_num = boxes0.shape

    # mean over anchors of objectness channel 4, then top-k.
    # (B*G*A ~ few hundred scalars -> plain JAX; a Pallas kernel here is pure
    #  relayout / masked-store / launch overhead.)
    mean_i = boxes0[:, :, :, 4].mean(axis=2)                          # (B, G)
    _, indices = jax.lax.top_k(mean_i, cfg.select_num)                # (B, select)

    # masked_select with a scattered one-hot mask keeps ascending grid order,
    # which jnp.sort(indices) reproduces exactly.
    sel_idx = jnp.sort(indices, axis=1)                               # (B, select)
    new_box_sml = jnp.take_along_axis(boxes0, sel_idx[:, :, None, None], axis=1)

    # channel-last gather straight into the fused head (no NCHW round trip)
    new_feature = jnp.take_along_axis(new_large_tok, sel_idx[:, :, None], axis=1)  # (B, select, 1024)

    # linear_vs -> linear_tx -> WeakREChead eval path, fused in one Pallas kernel.
    # TODO(synk): WeakREChead training contrastive loss and get_boxes decoding are not defined
    # in the provided snippet; eval path returns anchor predictions + selected boxes instead.
    sim, predictions_s = pallas_head_fused(
        new_feature, text_features,
        params["vs_w"], params["vs_b"], params["tx_w"], params["tx_b"])
    return predictions_s, sim, new_box_sml


# ----------------------------------------------------------------------------
if __name__ == "__main__":
    cfg = SimpleNamespace(hidden_size=128, select_num=16, class_num=3, vocab_size=100)

    key = jax.random.PRNGKey(0)
    kp, ki, kt = jax.random.split(key, 3)
    params = init_params(kp, cfg)

    image_input = jax.random.normal(ki, (2, 3, 32, 32), jnp.float32)      # NCHW image
    text_input = jax.random.randint(kt, (2, 8), 0, cfg.vocab_size)         # token ids

    fwd = jax.jit(lambda p, img, txt: pig_detector_forward(p, cfg, img, txt))
    pred, sim, boxes = fwd(params, image_input, text_input)
    jax.block_until_ready((pred, sim, boxes))

    assert pred.shape == (2, cfg.select_num) and pred.dtype == jnp.bool_
    assert sim.shape == (2, cfg.select_num)
    assert boxes.shape == (2, cfg.select_num, 3, 5 + cfg.class_num)
    # exactly one predicted anchor per batch element (single-hot argmax)
    assert bool(jnp.all(pred.sum(axis=1) == 1))
    print("KERNEL_OK")
</pallas_src>

<mosaic_0001>
module attributes {stable_mosaic.version = 11 : i64} {
  func.func @_matmul_bias_kernel(%arg0: i32, %arg1: memref<128x256xf32, #tpu.memory_space<vmem>>, %arg2: memref<256x1024xbf16, #tpu.memory_space<vmem>>, %arg3: memref<1x1024xf32, #tpu.memory_space<vmem>>, %arg4: memref<128x1024xf32, #tpu.memory_space<vmem>>) attributes {dimension_semantics = [#tpu.dimension_semantics<parallel>], iteration_bounds = array<i64: 1>, scalar_prefetch = 0 : i64, scratch_operands = 0 : i64, tpu.core_type = #tpu.core_type<tc>, window_params = [{transform_indices = @transform_0, window_bounds = array<i64: 128, 256>}, {pipeline_mode = #tpu.pipeline_mode<synchronous>, transform_indices = @transform_1, window_bounds = array<i64: 256, 1024>}, {pipeline_mode = #tpu.pipeline_mode<synchronous>, transform_indices = @transform_2, window_bounds = array<i64: 1, 1024>}, {transform_indices = @transform_3, window_bounds = array<i64: 128, 1024>}]} {
    %c0 = arith.constant 0 : index
    %c0_0 = arith.constant 0 : index
    %0 = vector.load %arg1[%c0, %c0_0] : memref<128x256xf32, #tpu.memory_space<vmem>>, vector<128x256xf32>
    %1 = arith.truncf %0 : vector<128x256xf32> to vector<128x256xbf16>
    %c0_1 = arith.constant 0 : index
    %c0_2 = arith.constant 0 : index
    %2 = vector.load %arg2[%c0_1, %c0_2] : memref<256x1024xbf16, #tpu.memory_space<vmem>>, vector<256x1024xbf16>
    %cst = arith.constant dense<0.000000e+00> : vector<128x1024xf32>
    %3 = tpu.matmul %1, %2, %cst {dimension_numbers = #tpu.dot_dimension_numbers<[1], [0], [0], [1], [0, 0, 1, 1], [], []>} : vector<128x256xbf16>, vector<256x1024xbf16>, vector<128x1024xf32> -> vector<128x1024xf32>
    %c0_3 = arith.constant 0 : index
    %c0_4 = arith.constant 0 : index
    %4 = vector.load %arg3[%c0_3, %c0_4] : memref<1x1024xf32, #tpu.memory_space<vmem>>, vector<1x1024xf32>
    %5 = vector.broadcast %4 : vector<1x1024xf32> to vector<128x1024xf32>
    %6 = arith.addf %3, %5 : vector<128x1024xf32>
    %c0_5 = arith.constant 0 : index
    %c0_6 = arith.constant 0 : index
    %7 = vector.load %arg4[%c0_5, %c0_6] : memref<128x1024xf32, #tpu.memory_space<vmem>>, vector<128x1024xf32>
    tpu.vector_store %arg4[%c0_5, %c0_6], %6 {strides = array<i32>} : memref<128x1024xf32, #tpu.memory_space<vmem>>, vector<128x1024xf32>,
    return
  }
  func.func @transform_0(%arg0: i32) -> (i32, i32) {
    %c0_i32 = arith.constant 0 : i32
    %c0_i32_0 = arith.constant 0 : i32
    return %arg0, %c0_i32 : i32, i32
  }
  func.func @transform_1(%arg0: i32) -> (i32, i32) {
    %c0_i32 = arith.constant 0 : i32
    %c0_i32_0 = arith.constant 0 : i32
    %c0_i32_1 = arith.constant 0 : i32
    return %c0_i32, %c0_i32_0 : i32, i32
  }
  func.func @transform_2(%arg0: i32) -> (i32, i32) {
    %c0_i32 = arith.constant 0 : i32
    %c0_i32_0 = arith.constant 0 : i32
    %c0_i32_1 = arith.constant 0 : i32
    return %c0_i32, %c0_i32_0 : i32, i32
  }
  func.func @transform_3(%arg0: i32) -> (i32, i32) {
    %c0_i32 = arith.constant 0 : i32
    %c0_i32_0 = arith.constant 0 : i32
    return %arg0, %c0_i32 : i32, i32
  }
}

module attributes {stable_mosaic.version = 11 : i64} {
  func.func @_head_fused_kernel(%arg0: memref<32x1024xf32, #tpu.memory_space<vmem>>, %arg1: memref<2x128xf32, #tpu.memory_space<vmem>>, %arg2: memref<1024x128xbf16, #tpu.memory_space<vmem>>, %arg3: memref<1x128xf32, #tpu.memory_space<vmem>>, %arg4: memref<128x128xbf16, #tpu.memory_space<vmem>>, %arg5: memref<1x128xf32, #tpu.memory_space<vmem>>, %arg6: memref<2x16xf32, #tpu.memory_space<vmem>>, %arg7: memref<2x16xi32, #tpu.memory_space<vmem>>) attributes {dimension_semantics = [], scalar_prefetch = 0 : i64, scratch_operands = 0 : i64, tpu.core_type = #tpu.core_type<tc>} {
    %c0 = arith.constant 0 : index
    %c0_0 = arith.constant 0 : index
    %0 = vector.load %arg0[%c0, %c0_0] : memref<32x1024xf32, #tpu.memory_space<vmem>>, vector<32x1024xf32>
    %1 = arith.truncf %0 : vector<32x1024xf32> to vector<32x1024xbf16>
    %c0_1 = arith.constant 0 : index
    %c0_2 = arith.constant 0 : index
    %2 = vector.load %arg2[%c0_1, %c0_2] : memref<1024x128xbf16, #tpu.memory_space<vmem>>, vector<1024x128xbf16>
    %cst = arith.constant dense<0.000000e+00> : vector<32x128xf32>
    %3 = tpu.matmul %1, %2, %cst {dimension_numbers = #tpu.dot_dimension_numbers<[1], [0], [0], [1], [0, 0, 1, 1], [], []>} : vector<32x1024xbf16>, vector<1024x128xbf16>, vector<32x128xf32> -> vector<32x128xf32>
    %c0_3 = arith.constant 0 : index
    %c0_4 = arith.constant 0 : index
    %4 = vector.load %arg3[%c0_3, %c0_4] : memref<1x128xf32, #tpu.memory_space<vmem>>, vector<1x128xf32>
    %5 = vector.broadcast %4 : vector<1x128xf32> to vector<32x128xf32>
    %6 = arith.addf %3, %5 : vector<32x128xf32>
    %c0_5 = arith.constant 0 : index
    %c0_6 = arith.constant 0 : index
    %7 = vector.load %arg1[%c0_5, %c0_6] : memref<2x128xf32, #tpu.memory_space<vmem>>, vector<2x128xf32>
    %8 = arith.truncf %7 : vector<2x128xf32> to vector<2x128xbf16>
    %c0_7 = arith.constant 0 : index
    %c0_8 = arith.constant 0 : index
    %9 = vector.load %arg4[%c0_7, %c0_8] : memref<128x128xbf16, #tpu.memory_space<vmem>>, vector<128x128xbf16>
    %cst_9 = arith.constant dense<0.000000e+00> : vector<2x128xf32>
    %10 = tpu.matmul %8, %9, %cst_9 {dimension_numbers = #tpu.dot_dimension_numbers<[1], [0], [0], [1], [0, 0, 1, 1], [], []>} : vector<2x128xbf16>, vector<128x128xbf16>, vector<2x128xf32> -> vector<2x128xf32>
    %c0_10 = arith.constant 0 : index
    %c0_11 = arith.constant 0 : index
    %11 = vector.load %arg5[%c0_10, %c0_11] : memref<1x128xf32, #tpu.memory_space<vmem>>, vector<1x128xf32>
    %12 = vector.broadcast %11 : vector<1x128xf32> to vector<2x128xf32>
    %13 = arith.addf %10, %12 : vector<2x128xf32>
    %14 = arith.mulf %6, %6 : vector<32x128xf32>
    %cst_12 = arith.constant dense<0.000000e+00> : vector<32xf32>
    %15 = vector.multi_reduction <add>, %14, %cst_12 [1] : vector<32x128xf32> to vector<32xf32>
    %16 = vector.shape_cast %15 : vector<32xf32> to vector<32x1xf32>
    %cst_13 = arith.constant 9.99999996E-13 : f32
    %17 = vector.broadcast %cst_13 : f32 to vector<32x1xf32>
    %18 = arith.addf %16, %17 : vector<32x1xf32>
    %19 = math.rsqrt %18 : vector<32x1xf32>
    %20 = vector.broadcast %19 : vector<32x1xf32> to vector<32x128xf32>
    %21 = arith.mulf %6, %20 : vector<32x128xf32>
    %22 = arith.mulf %13, %13 : vector<2x128xf32>
    %cst_14 = arith.constant dense<0.000000e+00> : vector<2xf32>
    %23 = vector.multi_reduction <add>, %22, %cst_14 [1] : vector<2x128xf32> to vector<2xf32>
    %24 = vector.shape_cast %23 : vector<2xf32> to vector<2x1xf32>
    %cst_15 = arith.constant 9.99999996E-13 : f32
    %25 = vector.broadcast %cst_15 : f32 to vector<2x1xf32>
    %26 = arith.addf %24, %25 : vector<2x1xf32>
    %27 = math.rsqrt %26 : vector<2x1xf32>
    %28 = vector.broadcast %27 : vector<2x1xf32> to vector<2x128xf32>
    %29 = arith.mulf %13, %28 : vector<2x128xf32>
    %30 = vector.shape_cast %21 : vector<32x128xf32> to vector<2x16x128xf32>
    %31 = vector.shape_cast %29 : vector<2x128xf32> to vector<2x1x128xf32>
    %32 = vector.broadcast %31 : vector<2x1x128xf32> to vector<2x16x128xf32>
    %33 = arith.mulf %30, %32 : vector<2x16x128xf32>
    %cst_16 = arith.constant dense<0.000000e+00> : vector<2x16xf32>
    %34 = vector.multi_reduction <add>, %33, %cst_16 [2] : vector<2x16x128xf32> to vector<2x16xf32>
    %35 = tpu.iota {dimensions = array<i32: 1>} : vector<2x16xi32>
    %cst_17 = arith.constant dense<0xFF800000> : vector<2xf32>
    %36 = vector.multi_reduction <maximumf>, %34, %cst_17 [1] : vector<2x16xf32> to vector<2xf32>
    %37 = vector.shape_cast %36 : vector<2xf32> to vector<2x1xf32>
    %38 = vector.broadcast %37 : vector<2x1xf32> to vector<2x16xf32>
    %39 = arith.cmpf oge, %34, %38 : vector<2x16xf32>
    %c16_i32 = arith.constant 16 : i32
    %40 = vector.broadcast %c16_i32 : i32 to vector<2x16xi32>
    %41 = arith.select %39, %35, %40 : vector<2x16xi1>, vector<2x16xi32>
    %cst_18 = arith.constant dense<2147483647> : vector<2xi32>
    %42 = vector.multi_reduction <minsi>, %41, %cst_18 [1] : vector<2x16xi32> to vector<2xi32>
    %43 = vector.shape_cast %42 : vector<2xi32> to vector<2x1xi32>
    %c0_19 = arith.constant 0 : index
    %c0_20 = arith.constant 0 : index
    %44 = vector.load %arg6[%c0_19, %c0_20] : memref<2x16xf32, #tpu.memory_space<vmem>>, vector<2x16xf32>
    tpu.vector_store %arg6[%c0_19, %c0_20], %34 {strides = array<i32>} : memref<2x16xf32, #tpu.memory_space<vmem>>, vector<2x16xf32>,
    %45 = vector.broadcast %43 : vector<2x1xi32> to vector<2x16xi32>
    %46 = arith.cmpi eq, %35, %45 : vector<2x16xi32>
    %47 = arith.extui %46 : vector<2x16xi1> to vector<2x16xi32>
    %c0_21 = arith.constant 0 : index
    %c0_22 = arith.constant 0 : index
    %48 = vector.load %arg7[%c0_21, %c0_22] : memref<2x16xi32, #tpu.memory_space<vmem>>, vector<2x16xi32>
    tpu.vector_store %arg7[%c0_21, %c0_22], %47 {strides = array<i32>} : memref<2x16xi32, #tpu.memory_space<vmem>>, vector<2x16xi32>,
    return
  }
}

</mosaic_0001>

<llo_original>
// kernel: _lambda_.2
$region0: #{_lambda_.2}
  #allocation0 [shape = 'u32[]', space=smem, size = 0x4, offset = 0x4, fixed_abs, tag = 'smem constant byte address 0x4 - core index']
  #allocation1 [shape = 'u32[144,128]{1,0:T(1,128)}', space=vmem, size = 0x12000, scoped, tag = 'internal scratch']
  %s0 = inlined_call_operand.vmem [shape: f32[128,256], index: 0, kind: input, shape index: {}]
  %s1 = inlined_call_operand.vmem [shape: bf16[256,1024], index: 1, kind: input, shape index: {}]
  %s2 = inlined_call_operand.vmem [shape: f32[1,1024], index: 2, kind: input, shape index: {}]
  %s3 = inlined_call_operand.vmem [shape: f32[128,1024], index: 3, kind: output, shape index: {}]
  %s4 = sld [smem:[#allocation0]]
  $region22: #{_lambda_.2} parent=0
    _
  %s6 = ssub.s32 1, %s4
  %s7 = scalar_select 0, %s6, %s4
  // Predicated region
  $region2: #{_lambda_.2} parent=0 // pred_check
    _
  $region3: #{_lambda_.2} parent=0 // pred_check_branch
    %9 = sbr.rel (0) target = $region5
  $region4: #{_lambda_.2} parent=0 // pred_region
    _
  $region5: #{_lambda_.2} parent=0 // pred_fallthru
    _
  // Predicated region
  $region6: #{_lambda_.2} parent=0 // pred_check
    _
  $region7: #{_lambda_.2} parent=0 // pred_check_branch
    %11 = sbr.rel (0) target = $region9
  $region8: #{_lambda_.2} parent=0 // pred_region
    _
  $region9: #{_lambda_.2} parent=0 // pred_fallthru
    _
  // Predicated region
  $region10: #{_lambda_.2} parent=0 // pred_check
    _
  $region11: #{_lambda_.2} parent=0 // pred_check_branch
    %13 = sbr.rel (0) target = $region13
  $region12: #{_lambda_.2} parent=0 // pred_region
    _
  $region13: #{_lambda_.2} parent=0 // pred_fallthru
    _
  %v14 = vld [vmem:[%s0] sm:$0xff]
  %v15 = vld [vmem:[%s0 + $0x8] sm:$0xff]
  %v16 = vld [vmem:[%s0 + $0x10] sm:$0xff]
  %v17 = vld [vmem:[%s0 + $0x18] sm:$0xff]
  %v18 = vld [vmem:[%s0 + $0x20] sm:$0xff]
  %v19 = vld [vmem:[%s0 + $0x28] sm:$0xff]
  %v20 = vld [vmem:[%s0 + $0x30] sm:$0xff]
  %v21 = vld [vmem:[%s0 + $0x38] sm:$0xff]
  %v22 = vld [vmem:[%s0 + $0x40] sm:$0xff]
  %v23 = vld [vmem:[%s0 + $0x48] sm:$0xff]
  %v24 = vld [vmem:[%s0 + $0x50] sm:$0xff]
  %v25 = vld [vmem:[%s0 + $0x58] sm:$0xff]
  %v26 = vld [vmem:[%s0 + $0x60] sm:$0xff]
  %v27 = vld [vmem:[%s0 + $0x68] sm:$0xff]
  %v28 = vld [vmem:[%s0 + $0x70] sm:$0xff]
  %v29 = vld [vmem:[%s0 + $0x78] sm:$0xff]
  %v30 = vld [vmem:[%s0 + $0x80] sm:$0xff]
  %v31 = vld [vmem:[%s0 + $0x88] sm:$0xff]
  %v32 = vld [vmem:[%s0 + $0x90] sm:$0xff]
  %v33 = vld [vmem:[%s0 + $0x98] sm:$0xff]
  %v34 = vld [vmem:[%s0 + $0xa0] sm:$0xff]
  %v35 = vld [vmem:[%s0 + $0xa8] sm:$0xff]
  %v36 = vld [vmem:[%s0 + $0xb0] sm:$0xff]
  %v37 = vld [vmem:[%s0 + $0xb8] sm:$0xff]
  %v38 = vld [vmem:[%s0 + $0xc0] sm:$0xff]
  %v39 = vld [vmem:[%s0 + $0xc8] sm:$0xff]
  %v40 = vld [vmem:[%s0 + $0xd0] sm:$0xff]
  %v41 = vld [vmem:[%s0 + $0xd8] sm:$0xff]
  %v42 = vld [vmem:[%s0 + $0xe0] sm:$0xff]
  %v43 = vld [vmem:[%s0 + $0xe8] sm:$0xff]
  %v44 = vld [vmem:[%s0 + $0xf0] sm:$0xff]
  %v45 = vld [vmem:[%s0 + $0xf8] sm:$0xff]
  %v46 = vpack.c.bf16 %v16, %v14
  %v47 = vpack.c.bf16 %v17, %v15
  %v48 = vpack.c.bf16 %v20, %v18
  %v49 = vpack.c.bf16 %v21, %v19
  %v50 = vpack.c.bf16 %v24, %v22
  %v51 = vpack.c.bf16 %v25, %v23
  %v52 = vpack.c.bf16 %v28, %v26
  %v53 = vpack.c.bf16 %v29, %v27
  %v54 = vpack.c.bf16 %v32, %v30
  %v55 = vpack.c.bf16 %v33, %v31
  %v56 = vpack.c.bf16 %v36, %v34
  %v57 = vpack.c.bf16 %v37, %v35
  %v58 = vpack.c.bf16 %v40, %v38
  %v59 = vpack.c.bf16 %v41, %v39
  %v60 = vpack.c.bf16 %v44, %v42
  %v61 = vpack.c.bf16 %v45, %v43
  %v62 = vld [vmem:[%s1] sm:$0xff]
  %v63 = vld [vmem:[%s1 + $0x8] sm:$0xff]
  %v64 = vld [vmem:[%s1 + $0x10] sm:$0xff]
  %v65 = vld [vmem:[%s1 + $0x18] sm:$0xff]
  %v66 = vld [vmem:[%s1 + $0x20] sm:$0xff]
  %v67 = vld [vmem:[%s1 + $0x28] sm:$0xff]
  %v68 = vld [vmem:[%s1 + $0x30] sm:$0xff]
  %v69 = vld [vmem:[%s1 + $0x38] sm:$0xff]
  %v70 = vld [vmem:[%s1 + $0x40] sm:$0xff]
  %v71 = vld [vmem:[%s1 + $0x48] sm:$0xff]
  %v72 = vld [vmem:[%s1 + $0x50] sm:$0xff]
  %v73 = vld [vmem:[%s1 + $0x58] sm:$0xff]
  %v74 = vld [vmem:[%s1 + $0x60] sm:$0xff]
  %v75 = vld [vmem:[%s1 + $0x68] sm:$0xff]
  %v76 = vld [vmem:[%s1 + $0x70] sm:$0xff]
  %v77 = vld [vmem:[%s1 + $0x78] sm:$0xff]
  %v78 = vld [vmem:[%s1 + $0x80] sm:$0xff]
  %v79 = vld [vmem:[%s1 + $0x88] sm:$0xff]
  %v80 = vld [vmem:[%s1 + $0x90] sm:$0xff]
  %v81 = vld [vmem:[%s1 + $0x98] sm:$0xff]
  %v82 = vld [vmem:[%s1 + $0xa0] sm:$0xff]
  %v83 = vld [vmem:[%s1 + $0xa8] sm:$0xff]
  %v84 = vld [vmem:[%s1 + $0xb0] sm:$0xff]
  %v85 = vld [vmem:[%s1 + $0xb8] sm:$0xff]
  %v86 = vld [vmem:[%s1 + $0xc0] sm:$0xff]
  %v87 = vld [vmem:[%s1 + $0xc8] sm:$0xff]
  %v88 = vld [vmem:[%s1 + $0xd0] sm:$0xff]
  %v89 = vld [vmem:[%s1 + $0xd8] sm:$0xff]
  %v90 = vld [vmem:[%s1 + $0xe0] sm:$0xff]
  %v91 = vld [vmem:[%s1 + $0xe8] sm:$0xff]
  %v92 = vld [vmem:[%s1 + $0xf0] sm:$0xff]
  %v93 = vld [vmem:[%s1 + $0xf8] sm:$0xff]
  %v94 = vld [vmem:[%s1 + $0x100] sm:$0xff]
  %v95 = vld [vmem:[%s1 + $0x108] sm:$0xff]
  %v96 = vld [vmem:[%s1 + $0x110] sm:$0xff]
  %v97 = vld [vmem:[%s1 + $0x118] sm:$0xff]
  %v98 = vld [vmem:[%s1 + $0x120] sm:$0xff]
  %v99 = vld [vmem:[%s1 + $0x128] sm:$0xff]
  %v100 = vld [vmem:[%s1 + $0x130] sm:$0xff]
  %v101 = vld [vmem:[%s1 + $0x138] sm:$0xff]
  %v102 = vld [vmem:[%s1 + $0x140] sm:$0xff]
  %v103 = vld [vmem:[%s1 + $0x148] sm:$0xff]
  %v104 = vld [vmem:[%s1 + $0x150] sm:$0xff]
  %v105 = vld [vmem:[%s1 + $0x158] sm:$0xff]
  %v106 = vld [vmem:[%s1 + $0x160] sm:$0xff]
  %v107 = vld [vmem:[%s1 + $0x168] sm:$0xff]
  %v108 = vld [vmem:[%s1 + $0x170] sm:$0xff]
  %v109 = vld [vmem:[%s1 + $0x178] sm:$0xff]
  %v110 = vld [vmem:[%s1 + $0x180] sm:$0xff]
  %v111 = vld [vmem:[%s1 + $0x188] sm:$0xff]
  %v112 = vld [vmem:[%s1 + $0x190] sm:$0xff]
  %v113 = vld [vmem:[%s1 + $0x198] sm:$0xff]
  %v114 = vld [vmem:[%s1 + $0x1a0] sm:$0xff]
  %v115 = vld [vmem:[%s1 + $0x1a8] sm:$0xff]
  %v116 = vld [vmem:[%s1 + $0x1b0] sm:$0xff]
  %v117 = vld [vmem:[%s1 + $0x1b8] sm:$0xff]
  %v118 = vld [vmem:[%s1 + $0x1c0] sm:$0xff]
  %v119 = vld [vmem:[%s1 + $0x1c8] sm:$0xff]
  %v120 = vld [vmem:[%s1 + $0x1d0] sm:$0xff]
  %v121 = vld [vmem:[%s1 + $0x1d8] sm:$0xff]
  %v122 = vld [vmem:[%s1 + $0x1e0] sm:$0xff]
  %v123 = vld [vmem:[%s1 + $0x1e8] sm:$0xff]
  %v124 = vld [vmem:[%s1 + $0x1f0] sm:$0xff]
  %v125 = vld [vmem:[%s1 + $0x1f8] sm:$0xff]
  %v126 = vld [vmem:[%s1 + $0x200] sm:$0xff]
  %v127 = vld [vmem:[%s1 + $0x208] sm:$0xff]
  %v128 = vld [vmem:[%s1 + $0x210] sm:$0xff]
  %v129 = vld [vmem:[%s1 + $0x218] sm:$0xff]
  %v130 = vld [vmem:[%s1 + $0x220] sm:$0xff]
  %v131 = vld [vmem:[%s1 + $0x228] sm:$0xff]
  %v132 = vld [vmem:[%s1 + $0x230] sm:$0xff]
  %v133 = vld [vmem:[%s1 + $0x238] sm:$0xff]
  %v134 = vld [vmem:[%s1 + $0x240] sm:$0xff]
  %v135 = vld [vmem:[%s1 + $0x248] sm:$0xff]
  %v136 = vld [vmem:[%s1 + $0x250] sm:$0xff]
  %v137 = vld [vmem:[%s1 + $0x258] sm:$0xff]
  %v138 = vld [vmem:[%s1 + $0x260] sm:$0xff]
  %v139 = vld [vmem:[%s1 + $0x268] sm:$0xff]
  %v140 = vld [vmem:[%s1 + $0x270] sm:$0xff]
  %v141 = vld [vmem:[%s1 + $0x278] sm:$0xff]
  %v142 = vld [vmem:[%s1 + $0x280] sm:$0xff]
  %v143 = vld [vmem:[%s1 + $0x288] sm:$0xff]
  %v144 = vld [vmem:[%s1 + $0x290] sm:$0xff]
  %v145 = vld [vmem:[%s1 + $0x298] sm:$0xff]
  %v146 = vld [vmem:[%s1 + $0x2a0] sm:$0xff]
  %v147 = vld [vmem:[%s1 + $0x2a8] sm:$0xff]
  %v148 = vld [vmem:[%s1 + $0x2b0] sm:$0xff]
  %v149 = vld [vmem:[%s1 + $0x2b8] sm:$0xff]
  %v150 = vld [vmem:[%s1 + $0x2c0] sm:$0xff]
  %v151 = vld [vmem:[%s1 + $0x2c8] sm:$0xff]
  %v152 = vld [vmem:[%s1 + $0x2d0] sm:$0xff]
  %v153 = vld [vmem:[%s1 + $0x2d8] sm:$0xff]
  %v154 = vld [vmem:[%s1 + $0x2e0] sm:$0xff]
  %v155 = vld [vmem:[%s1 + $0x2e8] sm:$0xff]
  %v156 = vld [vmem:[%s1 + $0x2f0] sm:$0xff]
  %v157 = vld [vmem:[%s1 + $0x2f8] sm:$0xff]
  %v158 = vld [vmem:[%s1 + $0x300] sm:$0xff]
  %v159 = vld [vmem:[%s1 + $0x308] sm:$0xff]
  %v160 = vld [vmem:[%s1 + $0x310] sm:$0xff]
  %v161 = vld [vmem:[%s1 + $0x318] sm:$0xff]
  %v162 = vld [vmem:[%s1 + $0x320] sm:$0xff]
  %v163 = vld [vmem:[%s1 + $0x328] sm:$0xff]
  %v164 = vld [vmem:[%s1 + $0x330] sm:$0xff]
  %v165 = vld [vmem:[%s1 + $0x338] sm:$0xff]
  %v166 = vld [vmem:[%s1 + $0x340] sm:$0xff]
  %v167 = vld [vmem:[%s1 + $0x348] sm:$0xff]
  %v168 = vld [vmem:[%s1 + $0x350] sm:$0xff]
  %v169 = vld [vmem:[%s1 + $0x358] sm:$0xff]
  %v170 = vld [vmem:[%s1 + $0x360] sm:$0xff]
  %v171 = vld [vmem:[%s1 + $0x368] sm:$0xff]
  %v172 = vld [vmem:[%s1 + $0x370] sm:$0xff]
  %v173 = vld [vmem:[%s1 + $0x378] sm:$0xff]
  %v174 = vld [vmem:[%s1 + $0x380] sm:$0xff]
  %v175 = vld [vmem:[%s1 + $0x388] sm:$0xff]
  %v176 = vld [vmem:[%s1 + $0x390] sm:$0xff]
  %v177 = vld [vmem:[%s1 + $0x398] sm:$0xff]
  %v178 = vld [vmem:[%s1 + $0x3a0] sm:$0xff]
  %v179 = vld [vmem:[%s1 + $0x3a8] sm:$0xff]
  %v180 = vld [vmem:[%s1 + $0x3b0] sm:$0xff]
  %v181 = vld [vmem:[%s1 + $0x3b8] sm:$0xff]
  %v182 = vld [vmem:[%s1 + $0x3c0] sm:$0xff]
  %v183 = vld [vmem:[%s1 + $0x3c8] sm:$0xff]
  %v184 = vld [vmem:[%s1 + $0x3d0] sm:$0xff]
  %v185 = vld [vmem:[%s1 + $0x3d8] sm:$0xff]
  %v186 = vld [vmem:[%s1 + $0x3e0] sm:$0xff]
  %v187 = vld [vmem:[%s1 + $0x3e8] sm:$0xff]
  %v188 = vld [vmem:[%s1 + $0x3f0] sm:$0xff]
  %v189 = vld [vmem:[%s1 + $0x3f8] sm:$0xff]
  %v190 = vld [vmem:[%s2] sm:$0xff]
  %v192 = vlaneseq
  %v193 = vshrl.u32 %v192, 7
  %v194 = vsub.s32 0, %v193
  %v195 = vrot.slane %v190, %v194
  %v196 = vlaneseq
  %v197 = vshrl.u32 %v196, 7
  %v198 = vsub.s32 1, %v197
  %v199 = vrot.slane %v190, %v198
  %v200 = vlaneseq
  %v201 = vshrl.u32 %v200, 7
  %v202 = vsub.s32 2, %v201
  %v203 = vrot.slane %v190, %v202
  %v204 = vlaneseq
  %v205 = vshrl.u32 %v204, 7
  %v206 = vsub.s32 3, %v205
  %v207 = vrot.slane %v190, %v206
  %v208 = vlaneseq
  %v209 = vshrl.u32 %v208, 7
  %v210 = vsub.s32 4, %v209
  %v211 = vrot.slane %v190, %v210
  %v212 = vlaneseq
  %v213 = vshrl.u32 %v212, 7
  %v214 = vsub.s32 5, %v213
  %v215 = vrot.slane %v190, %v214
  %v216 = vlaneseq
  %v217 = vshrl.u32 %v216, 7
  %v218 = vsub.s32 6, %v217
  %v219 = vrot.slane %v190, %v218
  %v220 = vlaneseq
  %v221 = vshrl.u32 %v220, 7
  %v222 = vsub.s32 7, %v221
  %v223 = vrot.slane %v190, %v222
  %v360 = vunpack.c.l.b16 %v62
  %v361 = vunpack.c.h.b16 %v62
  %v362 = vunpack.c.l.b16 %v63
  %v363 = vunpack.c.h.b16 %v63
  %v364 = vunpack.c.l.b16 %v64
  %v365 = vunpack.c.h.b16 %v64
  %v366 = vunpack.c.l.b16 %v65
  %v367 = vunpack.c.h.b16 %v65
  %v368 = vunpack.c.l.b16 %v66
  %v369 = vunpack.c.h.b16 %v66
  %v370 = vunpack.c.l.b16 %v67
  %v371 = vunpack.c.h.b16 %v67
  %v372 = vunpack.c.l.b16 %v68
  %v373 = vunpack.c.h.b16 %v68
  %v374 = vunpack.c.l.b16 %v69
  %v375 = vunpack.c.h.b16 %v69
  %v376 = vunpack.c.l.b16 %v70
  %v377 = vunpack.c.h.b16 %v70
  %v378 = vunpack.c.l.b16 %v71
  %v379 = vunpack.c.h.b16 %v71
  %v380 = vunpack.c.l.b16 %v72
  %v381 = vunpack.c.h.b16 %v72
  %v382 = vunpack.c.l.b16 %v73
  %v383 = vunpack.c.h.b16 %v73
  %v384 = vunpack.c.l.b16 %v74
  %v385 = vunpack.c.h.b16 %v74
  %v386 = vunpack.c.l.b16 %v75
  %v387 = vunpack.c.h.b16 %v75
  %v388 = vunpack.c.l.b16 %v76
  %v389 = vunpack.c.h.b16 %v76
  %v390 = vunpack.c.l.b16 %v77
  %v391 = vunpack.c.h.b16 %v77
  %v392 = vunpack.c.l.b16 %v78
  %v393 = vunpack.c.h.b16 %v78
  %v394 = vunpack.c.l.b16 %v79
  %v395 = vunpack.c.h.b16 %v79
  %v396 = vunpack.c.l.b16 %v80
  %v397 = vunpack.c.h.b16 %v80
  %v398 = vunpack.c.l.b16 %v81
  %v399 = vunpack.c.h.b16 %v81
  %v400 = vunpack.c.l.b16 %v82
  %v401 = vunpack.c.h.b16 %v82
  %v402 = vunpack.c.l.b16 %v83
  %v403 = vunpack.c.h.b16 %v83
  %v404 = vunpack.c.l.b16 %v84
  %v405 = vunpack.c.h.b16 %v84
  %v406 = vunpack.c.l.b16 %v85
  %v407 = vunpack.c.h.b16 %v85
  %v408 = vunpack.c.l.b16 %v86
  %v409 = vunpack.c.h.b16 %v86
  %v410 = vunpack.c.l.b16 %v87
  %v411 = vunpack.c.h.b16 %v87
  %v412 = vunpack.c.l.b16 %v88
  %v413 = vunpack.c.h.b16 %v88
  %v414 = vunpack.c.l.b16 %v89
  %v415 = vunpack.c.h.b16 %v89
  %v416 = vunpack.c.l.b16 %v90
  %v417 = vunpack.c.h.b16 %v90
  %v418 = vunpack.c.l.b16 %v91
  %v419 = vunpack.c.h.b16 %v91
  %v420 = vunpack.c.l.b16 %v92
  %v421 = vunpack.c.h.b16 %v92
  %v422 = vunpack.c.l.b16 %v93
  %v423 = vunpack.c.h.b16 %v93
  %v424 = vunpack.c.l.b16 %v94
  %v425 = vunpack.c.h.b16 %v94
  %v426 = vunpack.c.l.b16 %v95
  %v427 = vunpack.c.h.b16 %v95
  %v428 = vunpack.c.l.b16 %v96
  %v429 = vunpack.c.h.b16 %v96
  %v430 = vunpack.c.l.b16 %v97
  %v431 = vunpack.c.h.b16 %v97
  %v432 = vunpack.c.l.b16 %v98
  %v433 = vunpack.c.h.b16 %v98
  %v434 = vunpack.c.l.b16 %v99
  %v435 = vunpack.c.h.b16 %v99
  %v436 = vunpack.c.l.b16 %v100
  %v437 = vunpack.c.h.b16 %v100
  %v438 = vunpack.c.l.b16 %v101
  %v439 = vunpack.c.h.b16 %v101
  %v440 = vunpack.c.l.b16 %v102
  %v441 = vunpack.c.h.b16 %v102
  %v442 = vunpack.c.l.b16 %v103
  %v443 = vunpack.c.h.b16 %v103
  %v444 = vunpack.c.l.b16 %v104
  %v445 = vunpack.c.h.b16 %v104
  %v446 = vunpack.c.l.b16 %v105
  %v447 = vunpack.c.h.b16 %v105
  %v448 = vunpack.c.l.b16 %v106
  %v449 = vunpack.c.h.b16 %v106
  %v450 = vunpack.c.l.b16 %v107
  %v451 = vunpack.c.h.b16 %v107
  %v452 = vunpack.c.l.b16 %v108
  %v453 = vunpack.c.h.b16 %v108
  %v454 = vunpack.c.l.b16 %v109
  %v455 = vunpack.c.h.b16 %v109
  %v456 = vunpack.c.l.b16 %v110
  %v457 = vunpack.c.h.b16 %v110
  %v458 = vunpack.c.l.b16 %v111
  %v459 = vunpack.c.h.b16 %v111
  %v460 = vunpack.c.l.b16 %v112
  %v461 = vunpack.c.h.b16 %v112
  %v462 = vunpack.c.l.b16 %v113
  %v463 = vunpack.c.h.b16 %v113
  %v464 = vunpack.c.l.b16 %v114
  %v465 = vunpack.c.h.b16 %v114
  %v466 = vunpack.c.l.b16 %v115
  %v467 = vunpack.c.h.b16 %v115
  %v468 = vunpack.c.l.b16 %v116
  %v469 = vunpack.c.h.b16 %v116
  %v470 = vunpack.c.l.b16 %v117
  %v471 = vunpack.c.h.b16 %v117
  %v472 = vunpack.c.l.b16 %v118
  %v473 = vunpack.c.h.b16 %v118
  %v474 = vunpack.c.l.b16 %v119
  %v475 = vunpack.c.h.b16 %v119
  %v476 = vunpack.c.l.b16 %v120
  %v477 = vunpack.c.h.b16 %v120
  %v478 = vunpack.c.l.b16 %v121
  %v479 = vunpack.c.h.b16 %v121
  %v480 = vunpack.c.l.b16 %v122
  %v481 = vunpack.c.h.b16 %v122
  %v482 = vunpack.c.l.b16 %v123
  %v483 = vunpack.c.h.b16 %v123
  %v484 = vunpack.c.l.b16 %v124
  %v485 = vunpack.c.h.b16 %v124
  %v486 = vunpack.c.l.b16 %v125
  %v487 = vunpack.c.h.b16 %v125
  %v488 = vunpack.c.l.b16 %v126
  %v489 = vunpack.c.h.b16 %v126
  %v490 = vunpack.c.l.b16 %v127
  %v491 = vunpack.c.h.b16 %v127
  %v492 = vunpack.c.l.b16 %v128
  %v493 = vunpack.c.h.b16 %v128
  %v494 = vunpack.c.l.b16 %v129
  %v495 = vunpack.c.h.b16 %v129
  %v496 = vunpack.c.l.b16 %v130
  %v497 = vunpack.c.h.b16 %v130
  %v498 = vunpack.c.l.b16 %v131
  %v499 = vunpack.c.h.b16 %v131
  %v500 = vunpack.c.l.b16 %v132
  %v501 = vunpack.c.h.b16 %v132
  %v502 = vunpack.c.l.b16 %v133
  %v503 = vunpack.c.h.b16 %v133
  %v504 = vunpack.c.l.b16 %v134
  %v505 = vunpack.c.h.b16 %v134
  %v506 = vunpack.c.l.b16 %v135
  %v507 = vunpack.c.h.b16 %v135
  %v508 = vunpack.c.l.b16 %v136
  %v509 = vunpack.c.h.b16 %v136
  %v510 = vunpack.c.l.b16 %v137
  %v511 = vunpack.c.h.b16 %v137
  %v512 = vunpack.c.l.b16 %v138
  %v513 = vunpack.c.h.b16 %v138
  %v514 = vunpack.c.l.b16 %v139
  %v515 = vunpack.c.h.b16 %v139
  %v516 = vunpack.c.l.b16 %v140
  %v517 = vunpack.c.h.b16 %v140
  %v518 = vunpack.c.l.b16 %v141
  %v519 = vunpack.c.h.b16 %v141
  %v520 = vunpack.c.l.b16 %v142
  %v521 = vunpack.c.h.b16 %v142
  %v522 = vunpack.c.l.b16 %v143
  %v523 = vunpack.c.h.b16 %v143
  %v524 = vunpack.c.l.b16 %v144
  %v525 = vunpack.c.h.b16 %v144
  %v526 = vunpack.c.l.b16 %v145
  %v527 = vunpack.c.h.b16 %v145
  %v528 = vunpack.c.l.b16 %v146
  %v529 = vunpack.c.h.b16 %v146
  %v530 = vunpack.c.l.b16 %v147
  %v531 = vunpack.c.h.b16 %v147
  %v532 = vunpack.c.l.b16 %v148
  %v533 = vunpack.c.h.b16 %v148
  %v534 = vunpack.c.l.b16 %v149
  %v535 = vunpack.c.h.b16 %v149
  %v536 = vunpack.c.l.b16 %v150
  %v537 = vunpack.c.h.b16 %v150
  %v538 = vunpack.c.l.b16 %v151
  %v539 = vunpack.c.h.b16 %v151
  %v540 = vunpack.c.l.b16 %v152
  %v541 = vunpack.c.h.b16 %v152
  %v542 = vunpack.c.l.b16 %v153
  %v543 = vunpack.c.h.b16 %v153
  %v544 = vunpack.c.l.b16 %v154
  %v545 = vunpack.c.h.b16 %v154
  %v546 = vunpack.c.l.b16 %v155
  %v547 = vunpack.c.h.b16 %v155
  %v548 = vunpack.c.l.b16 %v156
  %v549 = vunpack.c.h.b16 %v156
  %v550 = vunpack.c.l.b16 %v157
  %v551 = vunpack.c.h.b16 %v157
  %v552 = vunpack.c.l.b16 %v158
  %v553 = vunpack.c.h.b16 %v158
  %v554 = vunpack.c.l.b16 %v159
  %v555 = vunpack.c.h.b16 %v159
  %v556 = vunpack.c.l.b16 %v160
  %v557 = vunpack.c.h.b16 %v160
  %v558 = vunpack.c.l.b16 %v161
  %v559 = vunpack.c.h.b16 %v161
  %v560 = vunpack.c.l.b16 %v162
  %v561 = vunpack.c.h.b16 %v162
  %v562 = vunpack.c.l.b16 %v163
  %v563 = vunpack.c.h.b16 %v163
  %v564 = vunpack.c.l.b16 %v164
  %v565 = vunpack.c.h.b16 %v164
  %v566 = vunpack.c.l.b16 %v165
  %v567 = vunpack.c.h.b16 %v165
  %v568 = vunpack.c.l.b16 %v166
  %v569 = vunpack.c.h.b16 %v166
  %v570 = vunpack.c.l.b16 %v167
  %v571 = vunpack.c.h.b16 %v167
  %v572 = vunpack.c.l.b16 %v168
  %v573 = vunpack.c.h.b16 %v168
  %v574 = vunpack.c.l.b16 %v169
  %v575 = vunpack.c.h.b16 %v169
  %v576 = vunpack.c.l.b16 %v170
  %v577 = vunpack.c.h.b16 %v170
  %v578 = vunpack.c.l.b16 %v171
  %v579 = vunpack.c.h.b16 %v171
  %v580 = vunpack.c.l.b16 %v172
  %v581 = vunpack.c.h.b16 %v172
  %v582 = vunpack.c.l.b16 %v173
  %v583 = vunpack.c.h.b16 %v173
  %v584 = vunpack.c.l.b16 %v174
  %v585 = vunpack.c.h.b16 %v174
  %v586 = vunpack.c.l.b16 %v175
  %v587 = vunpack.c.h.b16 %v175
  %v588 = vunpack.c.l.b16 %v176
  %v589 = vunpack.c.h.b16 %v176
  %v590 = vunpack.c.l.b16 %v177
  %v591 = vunpack.c.h.b16 %v177
  %v592 = vunpack.c.l.b16 %v178
  %v593 = vunpack.c.h.b16 %v178
  %v594 = vunpack.c.l.b16 %v179
  %v595 = vunpack.c.h.b16 %v179
  %v596 = vunpack.c.l.b16 %v180
  %v597 = vunpack.c.h.b16 %v180
  %v598 = vunpack.c.l.b16 %v181
  %v599 = vunpack.c.h.b16 %v181
  %v600 = vunpack.c.l.b16 %v182
  %v601 = vunpack.c.h.b16 %v182
  %v602 = vunpack.c.l.b16 %v183
  %v603 = vunpack.c.h.b16 %v183
  %v604 = vunpack.c.l.b16 %v184
  %v605 = vunpack.c.h.b16 %v184
  %v606 = vunpack.c.l.b16 %v185
  %v607 = vunpack.c.h.b16 %v185
  %v608 = vunpack.c.l.b16 %v186
  %v609 = vunpack.c.h.b16 %v186
  %v610 = vunpack.c.l.b16 %v187
  %v611 = vunpack.c.h.b16 %v187
  %v612 = vunpack.c.l.b16 %v188
  %v613 = vunpack.c.h.b16 %v188
  %v614 = vunpack.c.l.b16 %v189
  %v615 = vunpack.c.h.b16 %v189
  %v616 = vpack.c.b16 %v368, %v360
  %v617 = vpack.c.b16 %v369, %v361
  %v618 = vpack.c.b16 %v370, %v362
  %v619 = vpack.c.b16 %v371, %v363
  %v620 = vpack.c.b16 %v372, %v364
  %v621 = vpack.c.b16 %v373, %v365
  %v622 = vpack.c.b16 %v374, %v366
  %v623 = vpack.c.b16 %v375, %v367
  %v624 = vpack.c.b16 %v384, %v376
  %v625 = vpack.c.b16 %v385, %v377
  %v626 = vpack.c.b16 %v386, %v378
  %v627 = vpack.c.b16 %v387, %v379
  %v628 = vpack.c.b16 %v388, %v380
  %v629 = vpack.c.b16 %v389, %v381
  %v630 = vpack.c.b16 %v390, %v382
  %v631 = vpack.c.b16 %v391, %v383
  %v632 = vpack.c.b16 %v400, %v392
  %v633 = vpack.c.b16 %v401, %v393
  %v634 = vpack.c.b16 %v402, %v394
  %v635 = vpack.c.b16 %v403, %v395
  %v636 = vpack.c.b16 %v404, %v396
  %v637 = vpack.c.b16 %v405, %v397
  %v638 = vpack.c.b16 %v406, %v398
  %v639 = vpack.c.b16 %v407, %v399
  %v640 = vpack.c.b16 %v416, %v408
  %v641 = vpack.c.b16 %v417, %v409
  %v642 = vpack.c.b16 %v418, %v410
  %v643 = vpack.c.b16 %v419, %v411
  %v644 = vpack.c.b16 %v420, %v412
  %v645 = vpack.c.b16 %v421, %v413
  %v646 = vpack.c.b16 %v422, %v414
  %v647 = vpack.c.b16 %v423, %v415
  %v648 = vpack.c.b16 %v432, %v424
  %v649 = vpack.c.b16 %v433, %v425
  %v650 = vpack.c.b16 %v434, %v426
  %v651 = vpack.c.b16 %v435, %v427
  %v652 = vpack.c.b16 %v436, %v428
  %v653 = vpack.c.b16 %v437, %v429
  %v654 = vpack.c.b16 %v438, %v430
  %v655 = vpack.c.b16 %v439, %v431
  %v656 = vpack.c.b16 %v448, %v440
  %v657 = vpack.c.b16 %v449, %v441
  %v658 = vpack.c.b16 %v450, %v442
  %v659 = vpack.c.b16 %v451, %v443
  %v660 = vpack.c.b16 %v452, %v444
  %v661 = vpack.c.b16 %v453, %v445
  %v662 = vpack.c.b16 %v454, %v446
  %v663 = vpack.c.b16 %v455, %v447
  %v664 = vpack.c.b16 %v464, %v456
  %v665 = vpack.c.b16 %v465, %v457
  %v666 = vpack.c.b16 %v466, %v458
  %v667 = vpack.c.b16 %v467, %v459
  %v668 = vpack.c.b16 %v468, %v460
  %v669 = vpack.c.b16 %v469, %v461
  %v670 = vpack.c.b16 %v470, %v462
  %v671 = vpack.c.b16 %v471, %v463
  %v672 = vpack.c.b16 %v480, %v472
  %v673 = vpack.c.b16 %v481, %v473
  %v674 = vpack.c.b16 %v482, %v474
  %v675 = vpack.c.b16 %v483, %v475
  %v676 = vpack.c.b16 %v484, %v476
  %v677 = vpack.c.b16 %v485, %v477
  %v678 = vpack.c.b16 %v486, %v478
  %v679 = vpack.c.b16 %v487, %v479
  %v680 = vpack.c.b16 %v496, %v488
  %v681 = vpack.c.b16 %v497, %v489
  %v682 = vpack.c.b16 %v498, %v490
  %v683 = vpack.c.b16 %v499, %v491
  %v684 = vpack.c.b16 %v500, %v492
  %v685 = vpack.c.b16 %v501, %v493
  %v686 = vpack.c.b16 %v502, %v494
  %v687 = vpack.c.b16 %v503, %v495
  %v688 = vpack.c.b16 %v512, %v504
  %v689 = vpack.c.b16 %v513, %v505
  %v690 = vpack.c.b16 %v514, %v506
  %v691 = vpack.c.b16 %v515, %v507
  %v692 = vpack.c.b16 %v516, %v508
  %v693 = vpack.c.b16 %v517, %v509
  %v694 = vpack.c.b16 %v518, %v510
  %v695 = vpack.c.b16 %v519, %v511
  %v696 = vpack.c.b16 %v528, %v520
  %v697 = vpack.c.b16 %v529, %v521
  %v698 = vpack.c.b16 %v530, %v522
  %v699 = vpack.c.b16 %v531, %v523
  %v700 = vpack.c.b16 %v532, %v524
  %v701 = vpack.c.b16 %v533, %v525
  %v702 = vpack.c.b16 %v534, %v526
  %v703 = vpack.c.b16 %v535, %v527
  %v704 = vpack.c.b16 %v544, %v536
  %v705 = vpack.c.b16 %v545, %v537
  %v706 = vpack.c.b16 %v546, %v538
  %v707 = vpack.c.b16 %v547, %v539
  %v708 = vpack.c.b16 %v548, %v540
  %v709 = vpack.c.b16 %v549, %v541
  %v710 = vpack.c.b16 %v550, %v542
  %v711 = vpack.c.b16 %v551, %v543
  %v712 = vpack.c.b16 %v560, %v552
  %v713 = vpack.c.b16 %v561, %v553
  %v714 = vpack.c.b16 %v562, %v554
  %v715 = vpack.c.b16 %v563, %v555
  %v716 = vpack.c.b16 %v564, %v556
  %v717 = vpack.c.b16 %v565, %v557
  %v718 = vpack.c.b16 %v566, %v558
  %v719 = vpack.c.b16 %v567, %v559
  %v720 = vpack.c.b16 %v576, %v568
  %v721 = vpack.c.b16 %v577, %v569
  %v722 = vpack.c.b16 %v578, %v570
  %v723 = vpack.c.b16 %v579, %v571
  %v724 = vpack.c.b16 %v580, %v572
  %v725 = vpack.c.b16 %v581, %v573
  %v726 = vpack.c.b16 %v582, %v574
  %v727 = vpack.c.b16 %v583, %v575
  %v728 = vpack.c.b16 %v592, %v584
  %v729 = vpack.c.b16 %v593, %v585
  %v730 = vpack.c.b16 %v594, %v586
  %v731 = vpack.c.b16 %v595, %v587
  %v732 = vpack.c.b16 %v596, %v588
  %v733 = vpack.c.b16 %v597, %v589
  %v734 = vpack.c.b16 %v598, %v590
  %v735 = vpack.c.b16 %v599, %v591
  %v736 = vpack.c.b16 %v608, %v600
  %v737 = vpack.c.b16 %v609, %v601
  %v738 = vpack.c.b16 %v610, %v602
  %v739 = vpack.c.b16 %v611, %v603
  %v740 = vpack.c.b16 %v612, %v604
  %v741 = vpack.c.b16 %v613, %v605
  %v742 = vpack.c.b16 %v614, %v606
  %v743 = vpack.c.b16 %v615, %v607
  %872 = vmatprep.subr.bf16.mxu0 %v617
  %873 = vmatpush1.bf16.msra.mxu0 %v616
  %874 = vmatprep.subr.bf16.mxu0 %v625
  %875 = vmatpush1.bf16.msra.mxu0 %v624
  %876 = vmatprep.subr.bf16.mxu0 %v633
  %877 = vmatpush1.bf16.msra.mxu0 %v632
  %878 = vmatprep.subr.bf16.mxu0 %v641
  %879 = vmatpush1.bf16.msra.mxu0 %v640
  %880 = vmatprep.subr.bf16.mxu0 %v649
  %881 = vmatpush1.bf16.msra.mxu0 %v648
  %882 = vmatprep.subr.bf16.mxu0 %v657
  %883 = vmatpush1.bf16.msra.mxu0 %v656
  %884 = vmatprep.subr.bf16.mxu0 %v665
  %885 = vmatpush1.bf16.msra.mxu0 %v664
  %886 = vmatprep.subr.bf16.mxu0 %v673
  %887 = vmatpush1.bf16.msra.mxu0 %v672
  %888 = vmatprep.subr.bf16.mxu0 %v681
  %889 = vmatpush1.bf16.msra.mxu0 %v680
  %890 = vmatprep.subr.bf16.mxu0 %v689
  %891 = vmatpush1.bf16.msra.mxu0 %v688
  %892 = vmatprep.subr.bf16.mxu0 %v697
  %893 = vmatpush1.bf16.msra.mxu0 %v696
  %894 = vmatprep.subr.bf16.mxu0 %v705
  %895 = vmatpush1.bf16.msra.mxu0 %v704
  %896 = vmatprep.subr.bf16.mxu0 %v713
  %897 = vmatpush1.bf16.msra.mxu0 %v712
  %898 = vmatprep.subr.bf16.mxu0 %v721
  %899 = vmatpush1.bf16.msra.mxu0 %v720
  %900 = vmatprep.subr.bf16.mxu0 %v729
  %901 = vmatpush1.bf16.msra.mxu0 %v728
  %902 = vmatprep.subr.bf16.mxu0 %v737
  %903 = vmatpush1.bf16.msra.mxu0 %v736
  %904 = vmatprep.mubr.bf16.mxu0 %v47
  %905 = vmatmul.mubr.bf16.gmra.mrb[0].mxu0 %v46
  %v906 = vpop.f32.mrb[0].mxu0
  %v907 = vadd.f32 %v195, %v906
  %v908 = vpop.f32.mrb[0].mxu0
  %v909 = vadd.f32 %v199, %v908
  %v910 = vpop.f32.mrb[0].mxu0
  %v911 = vadd.f32 %v195, %v910
  %v912 = vpop.f32.mrb[0].mxu0
  %v913 = vadd.f32 %v199, %v912
  %914 = vmatprep.mubr.bf16.mxu0 %v49
  %915 = vmatmul.mubr.bf16.gmra.mrb[0].mxu0 %v48
  %v916 = vpop.f32.mrb[0].mxu0
  %v917 = vadd.f32 %v195, %v916
  %v918 = vpop.f32.mrb[0].mxu0
  %v919 = vadd.f32 %v199, %v918
  %v920 = vpop.f32.mrb[0].mxu0
  %v921 = vadd.f32 %v195, %v920
  %v922 = vpop.f32.mrb[0].mxu0
  %v923 = vadd.f32 %v199, %v922
  %924 = vmatprep.mubr.bf16.mxu0 %v51
  %925 = vmatmul.mubr.bf16.gmra.mrb[0].mxu0 %v50
  %v926 = vpop.f32.mrb[0].mxu0
  %v927 = vadd.f32 %v195, %v926
  %v928 = vpop.f32.mrb[0].mxu0
  %v929 = vadd.f32 %v199, %v928
  %v930 = vpop.f32.mrb[0].mxu0
  %v931 = vadd.f32 %v195, %v930
  %v932 = vpop.f32.mrb[0].mxu0
  %v933 = vadd.f32 %v199, %v932
  %934 = vmatprep.mubr.bf16.mxu0 %v53
  %935 = vmatmul.mubr.bf16.gmra.mrb[0].mxu0 %v52
  %v936 = vpop.f32.mrb[0].mxu0
  %v937 = vadd.f32 %v195, %v936
  %v938 = vpop.f32.mrb[0].mxu0
  %v939 = vadd.f32 %v199, %v938
  %v940 = vpop.f32.mrb[0].mxu0
  %v941 = vadd.f32 %v195, %v940
  %v942 = vpop.f32.mrb[0].mxu0
  %v943 = vadd.f32 %v199, %v942
  %944 = vmatprep.mubr.bf16.mxu0 %v55
  %945 = vmatmul.mubr.bf16.gmra.mrb[0].mxu0 %v54
  %v946 = vpop.f32.mrb[0].mxu0
  %v947 = vadd.f32 %v195, %v946
  %v948 = vpop.f32.mrb[0].mxu0
  %v949 = vadd.f32 %v199, %v948
  %v950 = vpop.f32.mrb[0].mxu0
  %v951 = vadd.f32 %v195, %v950
  %v952 = vpop.f32.mrb[0].mxu0
  %v953 = vadd.f32 %v199, %v952
  %954 = vmatprep.mubr.bf16.mxu0 %v57
  %955 = vmatmul.mubr.bf16.gmra.mrb[0].mxu0 %v56
  %v956 = vpop.f32.mrb[0].mxu0
  %v957 = vadd.f32 %v195, %v956
  %v958 = vpop.f32.mrb[0].mxu0
  %v959 = vadd.f32 %v199, %v958
  %v960 = vpop.f32.mrb[0].mxu0
  %v961 = vadd.f32 %v195, %v960
  %v962 = vpop.f32.mrb[0].mxu0
  %v963 = vadd.f32 %v199, %v962
  %964 = vmatprep.mubr.bf16.mxu0 %v59
  %965 = vmatmul.mubr.bf16.gmra.mrb[0].mxu0 %v58
  %v966 = vpop.f32.mrb[0].mxu0
  %v967 = vadd.f32 %v195, %v966
  %v968 = vpop.f32.mrb[0].mxu0
  %v969 = vadd.f32 %v199, %v968
  %v970 = vpop.f32.mrb[0].mxu0
  %v971 = vadd.f32 %v195, %v970
  %v972 = vpop.f32.mrb[0].mxu0
  %v973 = vadd.f32 %v199, %v972
  %974 = vmatprep.mubr.bf16.mxu0 %v61
  %975 = vmatmul.mubr.bf16.gmra.mrb[0].mxu0 %v60
  %v976 = vpop.f32.mrb[0].mxu0
  %v977 = vadd.f32 %v195, %v976
  %v978 = vpop.f32.mrb[0].mxu0
  %v979 = vadd.f32 %v199, %v978
  %v980 = vpop.f32.mrb[0].mxu0
  %v981 = vadd.f32 %v195, %v980
  %v982 = vpop.f32.mrb[0].mxu0
  %v983 = vadd.f32 %v199, %v982
  %984 = vdwg.mxu0
  %985 = vmatprep.subr.bf16.mxu0 %v619
  %986 = vmatpush1.bf16.msra.mxu0 %v618
  %987 = vmatprep.subr.bf16.mxu0 %v627
  %988 = vmatpush1.bf16.msra.mxu0 %v626
  %989 = vmatprep.subr.bf16.mxu0 %v635
  %990 = vmatpush1.bf16.msra.mxu0 %v634
  %991 = vmatprep.subr.bf16.mxu0 %v643
  %992 = vmatpush1.bf16.msra.mxu0 %v642
  %993 = vmatprep.subr.bf16.mxu0 %v651
  %994 = vmatpush1.bf16.msra.mxu0 %v650
  %995 = vmatprep.subr.bf16.mxu0 %v659
  %996 = vmatpush1.bf16.msra.mxu0 %v658
  %997 = vmatprep.subr.bf16.mxu0 %v667
  %998 = vmatpush1.bf16.msra.mxu0 %v666
  %999 = vmatprep.subr.bf16.mxu0 %v675
  %1000 = vmatpush1.bf16.msra.mxu0 %v674
  %1001 = vmatprep.subr.bf16.mxu0 %v683
  %1002 = vmatpush1.bf16.msra.mxu0 %v682
  %1003 = vmatprep.subr.bf16.mxu0 %v691
  %1004 = vmatpush1.bf16.msra.mxu0 %v690
  %1005 = vmatprep.subr.bf16.mxu0 %v699
  %1006 = vmatpush1.bf16.msra.mxu0 %v698
  %1007 = vmatprep.subr.bf16.mxu0 %v707
  %1008 = vmatpush1.bf16.msra.mxu0 %v706
  %1009 = vmatprep.subr.bf16.mxu0 %v715
  %1010 = vmatpush1.bf16.msra.mxu0 %v714
  %1011 = vmatprep.subr.bf16.mxu0 %v723
  %1012 = vmatpush1.bf16.msra.mxu0 %v722
  %1013 = vmatprep.subr.bf16.mxu0 %v731
  %1014 = vmatpush1.bf16.msra.mxu0 %v730
  %1015 = vmatprep.subr.bf16.mxu0 %v739
  %1016 = vmatpush1.bf16.msra.mxu0 %v738
  %1017 = vmatprep.mubr.bf16.mxu0 %v47
  %1018 = vmatmul.mubr.bf16.gmra.mrb[0].mxu0 %v46
  %v1019 = vpop.f32.mrb[0].mxu0
  %v1020 = vadd.f32 %v203, %v1019
  %v1021 = vpop.f32.mrb[0].mxu0
  %v1022 = vadd.f32 %v207, %v1021
  %v1023 = vpop.f32.mrb[0].mxu0
  %v1024 = vadd.f32 %v203, %v1023
  %v1025 = vpop.f32.mrb[0].mxu0
  %v1026 = vadd.f32 %v207, %v1025
  %1027 = vmatprep.mubr.bf16.mxu0 %v49
  %1028 = vmatmul.mubr.bf16.gmra.mrb[0].mxu0 %v48
  %v1029 = vpop.f32.mrb[0].mxu0
  %v1030 = vadd.f32 %v203, %v1029
  %v1031 = vpop.f32.mrb[0].mxu0
  %v1032 = vadd.f32 %v207, %v1031
  %v1033 = vpop.f32.mrb[0].mxu0
  %v1034 = vadd.f32 %v203, %v1033
  %v1035 = vpop.f32.mrb[0].mxu0
  %v1036 = vadd.f32 %v207, %v1035
  %1037 = vmatprep.mubr.bf16.mxu0 %v51
  %1038 = vmatmul.mubr.bf16.gmra.mrb[0].mxu0 %v50
  %v1039 = vpop.f32.mrb[0].mxu0
  %v1040 = vadd.f32 %v203, %v1039
  %v1041 = vpop.f32.mrb[0].mxu0
  %v1042 = vadd.f32 %v207, %v1041
  %v1043 = vpop.f32.mrb[0].mxu0
  %v1044 = vadd.f32 %v203, %v1043
  %v1045 = vpop.f32.mrb[0].mxu0
  %v1046 = vadd.f32 %v207, %v1045
  %1047 = vmatprep.mubr.bf16.mxu0 %v53
  %1048 = vmatmul.mubr.bf16.gmra.mrb[0].mxu0 %v52
  %v1049 = vpop.f32.mrb[0].mxu0
  %v1050 = vadd.f32 %v203, %v1049
  %v1051 = vpop.f32.mrb[0].mxu0
  %v1052 = vadd.f32 %v207, %v1051
  %v1053 = vpop.f32.mrb[0].mxu0
  %v1054 = vadd.f32 %v203, %v1053
  %v1055 = vpop.f32.mrb[0].mxu0
  %v1056 = vadd.f32 %v207, %v1055
  %1057 = vmatprep.mubr.bf16.mxu0 %v55
  %1058 = vmatmul.mubr.bf16.gmra.mrb[0].mxu0 %v54
  %v1059 = vpop.f32.mrb[0].mxu0
  %v1060 = vadd.f32 %v203, %v1059
  %v1061 = vpop.f32.mrb[0].mxu0
  %v1062 = vadd.f32 %v207, %v1061
  %v1063 = vpop.f32.mrb[0].mxu0
  %v1064 = vadd.f32 %v203, %v1063
  %v1065 = vpop.f32.mrb[0].mxu0
  %v1066 = vadd.f32 %v207, %v1065
  %1067 = vmatprep.mubr.bf16.mxu0 %v57
  %1068 = vmatmul.mubr.bf16.gmra.mrb[0].mxu0 %v56
  %v1069 = vpop.f32.mrb[0].mxu0
  %v1070 = vadd.f32 %v203, %v1069
  %v1071 = vpop.f32.mrb[0].mxu0
  %v1072 = vadd.f32 %v207, %v1071
  %v1073 = vpop.f32.mrb[0].mxu0
  %v1074 = vadd.f32 %v203, %v1073
  %v1075 = vpop.f32.mrb[0].mxu0
  %v1076 = vadd.f32 %v207, %v1075
  %1077 = vmatprep.mubr.bf16.mxu0 %v59
  %1078 = vmatmul.mubr.bf16.gmra.mrb[0].mxu0 %v58
  %v1079 = vpop.f32.mrb[0].mxu0
  %v1080 = vadd.f32 %v203, %v1079
  %v1081 = vpop.f32.mrb[0].mxu0
  %v1082 = vadd.f32 %v207, %v1081
  %v1083 = vpop.f32.mrb[0].mxu0
  %v1084 = vadd.f32 %v203, %v1083
  %v1085 = vpop.f32.mrb[0].mxu0
  %v1086 = vadd.f32 %v207, %v1085
  %1087 = vmatprep.mubr.bf16.mxu0 %v61
  %1088 = vmatmul.mubr.bf16.gmra.mrb[0].mxu0 %v60
  %v1089 = vpop.f32.mrb[0].mxu0
  %v1090 = vadd.f32 %v203, %v1089
  %v1091 = vpop.f32.mrb[0].mxu0
  %v1092 = vadd.f32 %v207, %v1091
  %v1093 = vpop.f32.mrb[0].mxu0
  %v1094 = vadd.f32 %v203, %v1093
  %v1095 = vpop.f32.mrb[0].mxu0
  %v1096 = vadd.f32 %v207, %v1095
  %1097 = vdwg.mxu0
  %1098 = vmatprep.subr.bf16.mxu0 %v621
  %1099 = vmatpush1.bf16.msra.mxu0 %v620
  %1100 = vmatprep.subr.bf16.mxu0 %v629
  %1101 = vmatpush1.bf16.msra.mxu0 %v628
  %1102 = vmatprep.subr.bf16.mxu0 %v637
  %1103 = vmatpush1.bf16.msra.mxu0 %v636
  %1104 = vmatprep.subr.bf16.mxu0 %v645
  %1105 = vmatpush1.bf16.msra.mxu0 %v644
  %1106 = vmatprep.subr.bf16.mxu0 %v653
  %1107 = vmatpush1.bf16.msra.mxu0 %v652
  %1108 = vmatprep.subr.bf16.mxu0 %v661
  %1109 = vmatpush1.bf16.msra.mxu0 %v660
  %1110 = vmatprep.subr.bf16.mxu0 %v669
  %1111 = vmatpush1.bf16.msra.mxu0 %v668
  %1112 = vmatprep.subr.bf16.mxu0 %v677
  %1113 = vmatpush1.bf16.msra.mxu0 %v676
  %1114 = vmatprep.subr.bf16.mxu0 %v685
  %1115 = vmatpush1.bf16.msra.mxu0 %v684
  %1116 = vmatprep.subr.bf16.mxu0 %v693
  %1117 = vmatpush1.bf16.msra.mxu0 %v692
  %1118 = vmatprep.subr.bf16.mxu0 %v701
  %1119 = vmatpush1.bf16.msra.mxu0 %v700
  %1120 = vmatprep.subr.bf16.mxu0 %v709
  %1121 = vmatpush1.bf16.msra.mxu0 %v708
  %1122 = vmatprep.subr.bf16.mxu0 %v717
  %1123 = vmatpush1.bf16.msra.mxu0 %v716
  %1124 = vmatprep.subr.bf16.mxu0 %v725
  %1125 = vmatpush1.bf16.msra.mxu0 %v724
  %1126 = vmatprep.subr.bf16.mxu0 %v733
  %1127 = vmatpush1.bf16.msra.mxu0 %v732
  %1128 = vmatprep.subr.bf16.mxu0 %v741
  %1129 = vmatpush1.bf16.msra.mxu0 %v740
  %1130 = vmatprep.mubr.bf16.mxu0 %v47
  %1131 = vmatmul.mubr.bf16.gmra.mrb[0].mxu0 %v46
  %v1132 = vpop.f32.mrb[0].mxu0
  %v1133 = vadd.f32 %v211, %v1132
  %v1134 = vpop.f32.mrb[0].mxu0
  %v1135 = vadd.f32 %v215, %v1134
  %v1136 = vpop.f32.mrb[0].mxu0
  %v1137 = vadd.f32 %v211, %v1136
  %v1138 = vpop.f32.mrb[0].mxu0
  %v1139 = vadd.f32 %v215, %v1138
  %1140 = vmatprep.mubr.bf16.mxu0 %v49
  %1141 = vmatmul.mubr.bf16.gmra.mrb[0].mxu0 %v48
  %v1142 = vpop.f32.mrb[0].mxu0
  %v1143 = vadd.f32 %v211, %v1142
  %v1144 = vpop.f32.mrb[0].mxu0
  %v1145 = vadd.f32 %v215, %v1144
  %v1146 = vpop.f32.mrb[0].mxu0
  %v1147 = vadd.f32 %v211, %v1146
  %v1148 = vpop.f32.mrb[0].mxu0
  %v1149 = vadd.f32 %v215, %v1148
  %1150 = vmatprep.mubr.bf16.mxu0 %v51
  %1151 = vmatmul.mubr.bf16.gmra.mrb[0].mxu0 %v50
  %v1152 = vpop.f32.mrb[0].mxu0
  %v1153 = vadd.f32 %v211, %v1152
  %v1154 = vpop.f32.mrb[0].mxu0
  %v1155 = vadd.f32 %v215, %v1154
  %v1156 = vpop.f32.mrb[0].mxu0
  %v1157 = vadd.f32 %v211, %v1156
  %v1158 = vpop.f32.mrb[0].mxu0
  %v1159 = vadd.f32 %v215, %v1158
  %1160 = vmatprep.mubr.bf16.mxu0 %v53
  %1161 = vmatmul.mubr.bf16.gmra.mrb[0].mxu0 %v52
  %v1162 = vpop.f32.mrb[0].mxu0
  %v1163 = vadd.f32 %v211, %v1162
  %v1164 = vpop.f32.mrb[0].mxu0
  %v1165 = vadd.f32 %v215, %v1164
  %v1166 = vpop.f32.mrb[0].mxu0
  %v1167 = vadd.f32 %v211, %v1166
  %v1168 = vpop.f32.mrb[0].mxu0
  %v1169 = vadd.f32 %v215, %v1168
  %1170 = vmatprep.mubr.bf16.mxu0 %v55
  %1171 = vmatmul.mubr.bf16.gmra.mrb[0].mxu0 %v54
  %v1172 = vpop.f32.mrb[0].mxu0
  %v1173 = vadd.f32 %v211, %v1172
  %v1174 = vpop.f32.mrb[0].mxu0
  %v1175 = vadd.f32 %v215, %v1174
  %v1176 = vpop.f32.mrb[0].mxu0
  %v1177 = vadd.f32 %v211, %v1176
  %v1178 = vpop.f32.mrb[0].mxu0
  %v1179 = vadd.f32 %v215, %v1178
  %1180 = vmatprep.mubr.bf16.mxu0 %v57
  %1181 = vmatmul.mubr.bf16.gmra.mrb[0].mxu0 %v56
  %v1182 = vpop.f32.mrb[0].mxu0
  %v1183 = vadd.f32 %v211, %v1182
  %v1184 = vpop.f32.mrb[0].mxu0
  %v1185 = vadd.f32 %v215, %v1184
  %v1186 = vpop.f32.mrb[0].mxu0
  %v1187 = vadd.f32 %v211, %v1186
  %v1188 = vpop.f32.mrb[0].mxu0
  %v1189 = vadd.f32 %v215, %v1188
  %1190 = vmatprep.mubr.bf16.mxu0 %v59
  %1191 = vmatmul.mubr.bf16.gmra.mrb[0].mxu0 %v58
  %v1192 = vpop.f32.mrb[0].mxu0
  %v1193 = vadd.f32 %v211, %v1192
  %v1194 = vpop.f32.mrb[0].mxu0
  %v1195 = vadd.f32 %v215, %v1194
  %v1196 = vpop.f32.mrb[0].mxu0
  %v1197 = vadd.f32 %v211, %v1196
  %v1198 = vpop.f32.mrb[0].mxu0
  %v1199 = vadd.f32 %v215, %v1198
  %1200 = vmatprep.mubr.bf16.mxu0 %v61
  %1201 = vmatmul.mubr.bf16.gmra.mrb[0].mxu0 %v60
  %v1202 = vpop.f32.mrb[0].mxu0
  %v1203 = vadd.f32 %v211, %v1202
  %v1204 = vpop.f32.mrb[0].mxu0
  %v1205 = vadd.f32 %v215, %v1204
  %v1206 = vpop.f32.mrb[0].mxu0
  %v1207 = vadd.f32 %v211, %v1206
  %v1208 = vpop.f32.mrb[0].mxu0
  %v1209 = vadd.f32 %v215, %v1208
  %1210 = vdwg.mxu0
  %1211 = vmatprep.subr.bf16.mxu0 %v623
  %1212 = vmatpush1.bf16.msra.mxu0 %v622
  %1213 = vmatprep.subr.bf16.mxu0 %v631
  %1214 = vmatpush1.bf16.msra.mxu0 %v630
  %1215 = vmatprep.subr.bf16.mxu0 %v639
  %1216 = vmatpush1.bf16.msra.mxu0 %v638
  %1217 = vmatprep.subr.bf16.mxu0 %v647
  %1218 = vmatpush1.bf16.msra.mxu0 %v646
  %1219 = vmatprep.subr.bf16.mxu0 %v655
  %1220 = vmatpush1.bf16.msra.mxu0 %v654
  %1221 = vmatprep.subr.bf16.mxu0 %v663
  %1222 = vmatpush1.bf16.msra.mxu0 %v662
  %1223 = vmatprep.subr.bf16.mxu0 %v671
  %1224 = vmatpush1.bf16.msra.mxu0 %v670
  %1225 = vmatprep.subr.bf16.mxu0 %v679
  %1226 = vmatpush1.bf16.msra.mxu0 %v678
  %1227 = vmatprep.subr.bf16.mxu0 %v687
  %1228 = vmatpush1.bf16.msra.mxu0 %v686
  %1229 = vmatprep.subr.bf16.mxu0 %v695
  %1230 = vmatpush1.bf16.msra.mxu0 %v694
  %1231 = vmatprep.subr.bf16.mxu0 %v703
  %1232 = vmatpush1.bf16.msra.mxu0 %v702
  %1233 = vmatprep.subr.bf16.mxu0 %v711
  %1234 = vmatpush1.bf16.msra.mxu0 %v710
  %1235 = vmatprep.subr.bf16.mxu0 %v719
  %1236 = vmatpush1.bf16.msra.mxu0 %v718
  %1237 = vmatprep.subr.bf16.mxu0 %v727
  %1238 = vmatpush1.bf16.msra.mxu0 %v726
  %1239 = vmatprep.subr.bf16.mxu0 %v735
  %1240 = vmatpush1.bf16.msra.mxu0 %v734
  %1241 = vmatprep.subr.bf16.mxu0 %v743
  %1242 = vmatpush1.bf16.msra.mxu0 %v742
  %1243 = vmatprep.mubr.bf16.mxu0 %v47
  %1244 = vmatmul.mubr.bf16.gmra.mrb[0].mxu0 %v46
  %v1245 = vpop.f32.mrb[0].mxu0
  %v1246 = vadd.f32 %v219, %v1245
  %v1247 = vpop.f32.mrb[0].mxu0
  %v1248 = vadd.f32 %v223, %v1247
  %v1249 = vpop.f32.mrb[0].mxu0
  %v1250 = vadd.f32 %v219, %v1249
  %v1251 = vpop.f32.mrb[0].mxu0
  %v1252 = vadd.f32 %v223, %v1251
  %1253 = vmatprep.mubr.bf16.mxu0 %v49
  %1254 = vmatmul.mubr.bf16.gmra.mrb[0].mxu0 %v48
  %v1255 = vpop.f32.mrb[0].mxu0
  %v1256 = vadd.f32 %v219, %v1255
  %v1257 = vpop.f32.mrb[0].mxu0
  %v1258 = vadd.f32 %v223, %v1257
  %v1259 = vpop.f32.mrb[0].mxu0
  %v1260 = vadd.f32 %v219, %v1259
  %v1261 = vpop.f32.mrb[0].mxu0
  %v1262 = vadd.f32 %v223, %v1261
  %1263 = vmatprep.mubr.bf16.mxu0 %v51
  %1264 = vmatmul.mubr.bf16.gmra.mrb[0].mxu0 %v50
  %v1265 = vpop.f32.mrb[0].mxu0
  %v1266 = vadd.f32 %v219, %v1265
  %v1267 = vpop.f32.mrb[0].mxu0
  %v1268 = vadd.f32 %v223, %v1267
  %v1269 = vpop.f32.mrb[0].mxu0
  %v1270 = vadd.f32 %v219, %v1269
  %v1271 = vpop.f32.mrb[0].mxu0
  %v1272 = vadd.f32 %v223, %v1271
  %1273 = vmatprep.mubr.bf16.mxu0 %v53
  %1274 = vmatmul.mubr.bf16.gmra.mrb[0].mxu0 %v52
  %v1275 = vpop.f32.mrb[0].mxu0
  %v1276 = vadd.f32 %v219, %v1275
  %v1277 = vpop.f32.mrb[0].mxu0
  %v1278 = vadd.f32 %v223, %v1277
  %v1279 = vpop.f32.mrb[0].mxu0
  %v1280 = vadd.f32 %v219, %v1279
  %v1281 = vpop.f32.mrb[0].mxu0
  %v1282 = vadd.f32 %v223, %v1281
  %1283 = vmatprep.mubr.bf16.mxu0 %v55
  %1284 = vmatmul.mubr.bf16.gmra.mrb[0].mxu0 %v54
  %v1285 = vpop.f32.mrb[0].mxu0
  %v1286 = vadd.f32 %v219, %v1285
  %v1287 = vpop.f32.mrb[0].mxu0
  %v1288 = vadd.f32 %v223, %v1287
  %v1289 = vpop.f32.mrb[0].mxu0
  %v1290 = vadd.f32 %v219, %v1289
  %v1291 = vpop.f32.mrb[0].mxu0
  %v1292 = vadd.f32 %v223, %v1291
  %1293 = vmatprep.mubr.bf16.mxu0 %v57
  %1294 = vmatmul.mubr.bf16.gmra.mrb[0].mxu0 %v56
  %v1295 = vpop.f32.mrb[0].mxu0
  %v1296 = vadd.f32 %v219, %v1295
  %v1297 = vpop.f32.mrb[0].mxu0
  %v1298 = vadd.f32 %v223, %v1297
  %v1299 = vpop.f32.mrb[0].mxu0
  %v1300 = vadd.f32 %v219, %v1299
  %v1301 = vpop.f32.mrb[0].mxu0
  %v1302 = vadd.f32 %v223, %v1301
  %1303 = vmatprep.mubr.bf16.mxu0 %v59
  %1304 = vmatmul.mubr.bf16.gmra.mrb[0].mxu0 %v58
  %v1305 = vpop.f32.mrb[0].mxu0
  %v1306 = vadd.f32 %v219, %v1305
  %v1307 = vpop.f32.mrb[0].mxu0
  %v1308 = vadd.f32 %v223, %v1307
  %v1309 = vpop.f32.mrb[0].mxu0
  %v1310 = vadd.f32 %v219, %v1309
  %v1311 = vpop.f32.mrb[0].mxu0
  %v1312 = vadd.f32 %v223, %v1311
  %1313 = vmatprep.mubr.bf16.mxu0 %v61
  %1314 = vmatmul.mubr.bf16.gmra.mrb[0].mxu0 %v60
  %v1315 = vpop.f32.mrb[0].mxu0
  %v1316 = vadd.f32 %v219, %v1315
  %v1317 = vpop.f32.mrb[0].mxu0
  %v1318 = vadd.f32 %v223, %v1317
  %v1319 = vpop.f32.mrb[0].mxu0
  %v1320 = vadd.f32 %v219, %v1319
  %v1321 = vpop.f32.mrb[0].mxu0
  %v1322 = vadd.f32 %v223, %v1321
  %1323 = vdwg.mxu0
  %1324 = vst [vmem:[%s3] sm:$0xff] %v907
  %1325 = vst [vmem:[%s3 + $0x8] sm:$0xff] %v909
  %1326 = vst [vmem:[%s3 + $0x10] sm:$0xff] %v1020
  %1327 = vst [vmem:[%s3 + $0x18] sm:$0xff] %v1022
  %1328 = vst [vmem:[%s3 + $0x20] sm:$0xff] %v1133
  %1329 = vst [vmem:[%s3 + $0x28] sm:$0xff] %v1135
  %1330 = vst [vmem:[%s3 + $0x30] sm:$0xff] %v1246
  %1331 = vst [vmem:[%s3 + $0x38] sm:$0xff] %v1248
  %1332 = vst [vmem:[%s3 + $0x40] sm:$0xff] %v911
  %1333 = vst [vmem:[%s3 + $0x48] sm:$0xff] %v913
  %1334 = vst [vmem:[%s3 + $0x50] sm:$0xff] %v1024
  %1335 = vst [vmem:[%s3 + $0x58] sm:$0xff] %v1026
  %1336 = vst [vmem:[%s3 + $0x60] sm:$0xff] %v1137
  %1337 = vst [vmem:[%s3 + $0x68] sm:$0xff] %v1139
  %1338 = vst [vmem:[%s3 + $0x70] sm:$0xff] %v1250
  %1339 = vst [vmem:[%s3 + $0x78] sm:$0xff] %v1252
  %1340 = vst [vmem:[%s3 + $0x80] sm:$0xff] %v917
  %1341 = vst [vmem:[%s3 + $0x88] sm:$0xff] %v919
  %1342 = vst [vmem:[%s3 + $0x90] sm:$0xff] %v1030
  %1343 = vst [vmem:[%s3 + $0x98] sm:$0xff] %v1032
  %1344 = vst [vmem:[%s3 + $0xa0] sm:$0xff] %v1143
  %1345 = vst [vmem:[%s3 + $0xa8] sm:$0xff] %v1145
  %1346 = vst [vmem:[%s3 + $0xb0] sm:$0xff] %v1256
  %1347 = vst [vmem:[%s3 + $0xb8] sm:$0xff] %v1258
  %1348 = vst [vmem:[%s3 + $0xc0] sm:$0xff] %v921
  %1349 = vst [vmem:[%s3 + $0xc8] sm:$0xff] %v923
  %1350 = vst [vmem:[%s3 + $0xd0] sm:$0xff] %v1034
  %1351 = vst [vmem:[%s3 + $0xd8] sm:$0xff] %v1036
  %1352 = vst [vmem:[%s3 + $0xe0] sm:$0xff] %v1147
  %1353 = vst [vmem:[%s3 + $0xe8] sm:$0xff] %v1149
  %1354 = vst [vmem:[%s3 + $0xf0] sm:$0xff] %v1260
  %1355 = vst [vmem:[%s3 + $0xf8] sm:$0xff] %v1262
  %1356 = vst [vmem:[%s3 + $0x100] sm:$0xff] %v927
  %1357 = vst [vmem:[%s3 + $0x108] sm:$0xff] %v929
  %1358 = vst [vmem:[%s3 + $0x110] sm:$0xff] %v1040
  %1359 = vst [vmem:[%s3 + $0x118] sm:$0xff] %v1042
  %1360 = vst [vmem:[%s3 + $0x120] sm:$0xff] %v1153
  %1361 = vst [vmem:[%s3 + $0x128] sm:$0xff] %v1155
  %1362 = vst [vmem:[%s3 + $0x130] sm:$0xff] %v1266
  %1363 = vst [vmem:[%s3 + $0x138] sm:$0xff] %v1268
  %1364 = vst [vmem:[%s3 + $0x140] sm:$0xff] %v931
  %1365 = vst [vmem:[%s3 + $0x148] sm:$0xff] %v933
  %1366 = vst [vmem:[%s3 + $0x150] sm:$0xff] %v1044
  %1367 = vst [vmem:[%s3 + $0x158] sm:$0xff] %v1046
  %1368 = vst [vmem:[%s3 + $0x160] sm:$0xff] %v1157
  %1369 = vst [vmem:[%s3 + $0x168] sm:$0xff] %v1159
  %1370 = vst [vmem:[%s3 + $0x170] sm:$0xff] %v1270
  %1371 = vst [vmem:[%s3 + $0x178] sm:$0xff] %v1272
  %1372 = vst [vmem:[%s3 + $0x180] sm:$0xff] %v937
  %1373 = vst [vmem:[%s3 + $0x188] sm:$0xff] %v939
  %1374 = vst [vmem:[%s3 + $0x190] sm:$0xff] %v1050
  %1375 = vst [vmem:[%s3 + $0x198] sm:$0xff] %v1052
  %1376 = vst [vmem:[%s3 + $0x1a0] sm:$0xff] %v1163
  %1377 = vst [vmem:[%s3 + $0x1a8] sm:$0xff] %v1165
  %1378 = vst [vmem:[%s3 + $0x1b0] sm:$0xff] %v1276
  %1379 = vst [vmem:[%s3 + $0x1b8] sm:$0xff] %v1278
  %1380 = vst [vmem:[%s3 + $0x1c0] sm:$0xff] %v941
  %1381 = vst [vmem:[%s3 + $0x1c8] sm:$0xff] %v943
  %1382 = vst [vmem:[%s3 + $0x1d0] sm:$0xff] %v1054
  %1383 = vst [vmem:[%s3 + $0x1d8] sm:$0xff] %v1056
  %1384 = vst [vmem:[%s3 + $0x1e0] sm:$0xff] %v1167
  %1385 = vst [vmem:[%s3 + $0x1e8] sm:$0xff] %v1169
  %1386 = vst [vmem:[%s3 + $0x1f0] sm:$0xff] %v1280
  %1387 = vst [vmem:[%s3 + $0x1f8] sm:$0xff] %v1282
  %1388 = vst [vmem:[%s3 + $0x200] sm:$0xff] %v947
  %1389 = vst [vmem:[%s3 + $0x208] sm:$0xff] %v949
  %1390 = vst [vmem:[%s3 + $0x210] sm:$0xff] %v1060
  %1391 = vst [vmem:[%s3 + $0x218] sm:$0xff] %v1062
  %1392 = vst [vmem:[%s3 + $0x220] sm:$0xff] %v1173
  %1393 = vst [vmem:[%s3 + $0x228] sm:$0xff] %v1175
  %1394 = vst [vmem:[%s3 + $0x230] sm:$0xff] %v1286
  %1395 = vst [vmem:[%s3 + $0x238] sm:$0xff] %v1288
  %1396 = vst [vmem:[%s3 + $0x240] sm:$0xff] %v951
  %1397 = vst [vmem:[%s3 + $0x248] sm:$0xff] %v953
  %1398 = vst [vmem:[%s3 + $0x250] sm:$0xff] %v1064
  %1399 = vst [vmem:[%s3 + $0x258] sm:$0xff] %v1066
  %1400 = vst [vmem:[%s3 + $0x260] sm:$0xff] %v1177
  %1401 = vst [vmem:[%s3 + $0x268] sm:$0xff] %v1179
  %1402 = vst [vmem:[%s3 + $0x270] sm:$0xff] %v1290
  %1403 = vst [vmem:[%s3 + $0x278] sm:$0xff] %v1292
  %1404 = vst [vmem:[%s3 + $0x280] sm:$0xff] %v957
  %1405 = vst [vmem:[%s3 + $0x288] sm:$0xff] %v959
  %1406 = vst [vmem:[%s3 + $0x290] sm:$0xff] %v1070
  %1407 = vst [vmem:[%s3 + $0x298] sm:$0xff] %v1072
  %1408 = vst [vmem:[%s3 + $0x2a0] sm:$0xff] %v1183
  %1409 = vst [vmem:[%s3 + $0x2a8] sm:$0xff] %v1185
  %1410 = vst [vmem:[%s3 + $0x2b0] sm:$0xff] %v1296
  %1411 = vst [vmem:[%s3 + $0x2b8] sm:$0xff] %v1298
  %1412 = vst [vmem:[%s3 + $0x2c0] sm:$0xff] %v961
  %1413 = vst [vmem:[%s3 + $0x2c8] sm:$0xff] %v963
  %1414 = vst [vmem:[%s3 + $0x2d0] sm:$0xff] %v1074
  %1415 = vst [vmem:[%s3 + $0x2d8] sm:$0xff] %v1076
  %1416 = vst [vmem:[%s3 + $0x2e0] sm:$0xff] %v1187
  %1417 = vst [vmem:[%s3 + $0x2e8] sm:$0xff] %v1189
  %1418 = vst [vmem:[%s3 + $0x2f0] sm:$0xff] %v1300
  %1419 = vst [vmem:[%s3 + $0x2f8] sm:$0xff] %v1302
  %1420 = vst [vmem:[%s3 + $0x300] sm:$0xff] %v967
  %1421 = vst [vmem:[%s3 + $0x308] sm:$0xff] %v969
  %1422 = vst [vmem:[%s3 + $0x310] sm:$0xff] %v1080
  %1423 = vst [vmem:[%s3 + $0x318] sm:$0xff] %v1082
  %1424 = vst [vmem:[%s3 + $0x320] sm:$0xff] %v1193
  %1425 = vst [vmem:[%s3 + $0x328] sm:$0xff] %v1195
  %1426 = vst [vmem:[%s3 + $0x330] sm:$0xff] %v1306
  %1427 = vst [vmem:[%s3 + $0x338] sm:$0xff] %v1308
  %1428 = vst [vmem:[%s3 + $0x340] sm:$0xff] %v971
  %1429 = vst [vmem:[%s3 + $0x348] sm:$0xff] %v973
  %1430 = vst [vmem:[%s3 + $0x350] sm:$0xff] %v1084
  %1431 = vst [vmem:[%s3 + $0x358] sm:$0xff] %v1086
  %1432 = vst [vmem:[%s3 + $0x360] sm:$0xff] %v1197
  %1433 = vst [vmem:[%s3 + $0x368] sm:$0xff] %v1199
  %1434 = vst [vmem:[%s3 + $0x370] sm:$0xff] %v1310
  %1435 = vst [vmem:[%s3 + $0x378] sm:$0xff] %v1312
  %1436 = vst [vmem:[%s3 + $0x380] sm:$0xff] %v977
  %1437 = vst [vmem:[%s3 + $0x388] sm:$0xff] %v979
  %1438 = vst [vmem:[%s3 + $0x390] sm:$0xff] %v1090
  %1439 = vst [vmem:[%s3 + $0x398] sm:$0xff] %v1092
  %1440 = vst [vmem:[%s3 + $0x3a0] sm:$0xff] %v1203
  %1441 = vst [vmem:[%s3 + $0x3a8] sm:$0xff] %v1205
  %1442 = vst [vmem:[%s3 + $0x3b0] sm:$0xff] %v1316
  %1443 = vst [vmem:[%s3 + $0x3b8] sm:$0xff] %v1318
  %1444 = vst [vmem:[%s3 + $0x3c0] sm:$0xff] %v981
  %1445 = vst [vmem:[%s3 + $0x3c8] sm:$0xff] %v983
  %1446 = vst [vmem:[%s3 + $0x3d0] sm:$0xff] %v1094
  %1447 = vst [vmem:[%s3 + $0x3d8] sm:$0xff] %v1096
  %1448 = vst [vmem:[%s3 + $0x3e0] sm:$0xff] %v1207
  %1449 = vst [vmem:[%s3 + $0x3e8] sm:$0xff] %v1209
  %1450 = vst [vmem:[%s3 + $0x3f0] sm:$0xff] %v1320
  %1451 = vst [vmem:[%s3 + $0x3f8] sm:$0xff] %v1322
  // Predicated region
  $region14: #{_lambda_.2} parent=0 // pred_check
    _
  $region15: #{_lambda_.2} parent=0 // pred_check_branch
    %1453 = sbr.rel (0) target = $region17
  $region16: #{_lambda_.2} parent=0 // pred_region
    _
  $region17: #{_lambda_.2} parent=0 // pred_fallthru
    _
  // Predicated region
  $region18: #{_lambda_.2} parent=0 // pred_check
    _
  $region19: #{_lambda_.2} parent=0 // pred_check_branch
    %1455 = sbr.rel (0) target = $region21
  $region20: #{_lambda_.2} parent=0 // pred_region
    _
  $region21: #{_lambda_.2} parent=0 // pred_fallthru
    _

// kernel: _lambda_.3
$region0: #{_lambda_.3}
  #allocation0 [shape = 'u32[]', space=smem, size = 0x4, offset = 0x4, fixed_abs, tag = 'smem constant byte address 0x4 - core index']
  #allocation1 [shape = 'u32[144,128]{1,0:T(1,128)}', space=vmem, size = 0x12000, scoped, tag = 'internal scratch']
  %s0 = inlined_call_operand.vmem [shape: f32[32,1024], index: 0, kind: input, shape index: {}]
  %s1 = inlined_call_operand.vmem [shape: f32[2,128], index: 1, kind: input, shape index: {}]
  %s2 = inlined_call_operand.vmem [shape: bf16[1024,128], index: 2, kind: input, shape index: {}]
  %s3 = inlined_call_operand.vmem [shape: f32[1,128], index: 3, kind: input, shape index: {}]
  %s4 = inlined_call_operand.vmem [shape: bf16[128,128], index: 4, kind: input, shape index: {}]
  %s5 = inlined_call_operand.vmem [shape: f32[1,128], index: 5, kind: input, shape index: {}]
  %s6 = inlined_call_operand.hbm [shape: f32[2,16], index: 6, kind: output, shape index: {0}]
  %s7 = inlined_call_operand.vmem [shape: s32[2,16], index: 7, kind: output, shape index: {1}]
  %8 = xla_tuple %s6, %s7
  %s9 = sld [smem:[#allocation0]]
  $region42: #{_lambda_.3} parent=0
    _
  %s11 = ssub.s32 1, %s9
  %s12 = scalar_select 0, %s11, %s9
  $region1: #{_lambda_.3} parent=0
    #allocation2 [shape = 'u8[1024]{0}', space=vmem, size = 0x400, scoped, tag = 'output window, operand 0, single buffered']
    #allocation3 [shape = 's32[1]{0}', space=sflag, size = 0x4, scoped, tag = 'scoped memory for _lambda_.3']
    %13 = vsyncpa [#allocation3], 0
    // Predicated region
    $region2: #{_lambda_.3} parent=1 // pred_check
      _
    $region3: #{_lambda_.3} parent=1 // pred_check_branch
      %15 = sbr.rel (0) target = $region5
    $region4: #{_lambda_.3} parent=1 // pred_region
      _
    $region5: #{_lambda_.3} parent=1 // pred_fallthru
      _
    // Predicated region
    $region6: #{_lambda_.3} parent=1 // pred_check
      _
    $region7: #{_lambda_.3} parent=1 // pred_check_branch
      %17 = sbr.rel (0) target = $region9
    $region8: #{_lambda_.3} parent=1 // pred_region
      _
    $region9: #{_lambda_.3} parent=1 // pred_fallthru
      _
    // Predicated region
    $region10: #{_lambda_.3} parent=1 // pred_check
      _
    $region11: #{_lambda_.3} parent=1 // pred_check_branch
      %19 = sbr.rel (0) target = $region13
    $region12: #{_lambda_.3} parent=1 // pred_region
      _
    $region13: #{_lambda_.3} parent=1 // pred_fallthru
      _
    // Predicated region
    $region14: #{_lambda_.3} parent=1 // pred_check
      _
    $region15: #{_lambda_.3} parent=1 // pred_check_branch
      %21 = sbr.rel (0) target = $region17
    $region16: #{_lambda_.3} parent=1 // pred_region
      _
    $region17: #{_lambda_.3} parent=1 // pred_fallthru
      _
    // Predicated region
    $region18: #{_lambda_.3} parent=1 // pred_check
      _
    $region19: #{_lambda_.3} parent=1 // pred_check_branch
      %23 = sbr.rel (0) target = $region21
    $region20: #{_lambda_.3} parent=1 // pred_region
      _
    $region21: #{_lambda_.3} parent=1 // pred_fallthru
      _
    // Predicated region
    $region22: #{_lambda_.3} parent=1 // pred_check
      _
    $region23: #{_lambda_.3} parent=1 // pred_check_branch
      %25 = sbr.rel (0) target = $region25
    $region24: #{_lambda_.3} parent=1 // pred_region
      _
    $region25: #{_lambda_.3} parent=1 // pred_fallthru
      _
    %v27 = vld [vmem:[%s0] sm:$0xff]
    %v28 = vld [vmem:[%s0 + $0x8] sm:$0xff]
    %v29 = vld [vmem:[%s0 + $0x10] sm:$0xff]
    %v30 = vld [vmem:[%s0 + $0x18] sm:$0xff]
    %v31 = vld [vmem:[%s0 + $0x20] sm:$0xff]
    %v32 = vld [vmem:[%s0 + $0x28] sm:$0xff]
    %v33 = vld [vmem:[%s0 + $0x30] sm:$0xff]
    %v34 = vld [vmem:[%s0 + $0x38] sm:$0xff]
    %v35 = vld [vmem:[%s0 + $0x40] sm:$0xff]
    %v36 = vld [vmem:[%s0 + $0x48] sm:$0xff]
    %v37 = vld [vmem:[%s0 + $0x50] sm:$0xff]
    %v38 = vld [vmem:[%s0 + $0x58] sm:$0xff]
    %v39 = vld [vmem:[%s0 + $0x60] sm:$0xff]
    %v40 = vld [vmem:[%s0 + $0x68] sm:$0xff]
    %v41 = vld [vmem:[%s0 + $0x70] sm:$0xff]
    %v42 = vld [vmem:[%s0 + $0x78] sm:$0xff]
    %v43 = vld [vmem:[%s0 + $0x80] sm:$0xff]
    %v44 = vld [vmem:[%s0 + $0x88] sm:$0xff]
    %v45 = vld [vmem:[%s0 + $0x90] sm:$0xff]
    %v46 = vld [vmem:[%s0 + $0x98] sm:$0xff]
    %v47 = vld [vmem:[%s0 + $0xa0] sm:$0xff]
    %v48 = vld [vmem:[%s0 + $0xa8] sm:$0xff]
    %v49 = vld [vmem:[%s0 + $0xb0] sm:$0xff]
    %v50 = vld [vmem:[%s0 + $0xb8] sm:$0xff]
    %v51 = vld [vmem:[%s0 + $0xc0] sm:$0xff]
    %v52 = vld [vmem:[%s0 + $0xc8] sm:$0xff]
    %v53 = vld [vmem:[%s0 + $0xd0] sm:$0xff]
    %v54 = vld [vmem:[%s0 + $0xd8] sm:$0xff]
    %v55 = vld [vmem:[%s0 + $0xe0] sm:$0xff]
    %v56 = vld [vmem:[%s0 + $0xe8] sm:$0xff]
    %v57 = vld [vmem:[%s0 + $0xf0] sm:$0xff]
    %v58 = vld [vmem:[%s0 + $0xf8] sm:$0xff]
    %v59 = vpack.c.bf16 %v35, %v27
    %v60 = vpack.c.bf16 %v36, %v28
    %v61 = vpack.c.bf16 %v37, %v29
    %v62 = vpack.c.bf16 %v38, %v30
    %v63 = vpack.c.bf16 %v39, %v31
    %v64 = vpack.c.bf16 %v40, %v32
    %v65 = vpack.c.bf16 %v41, %v33
    %v66 = vpack.c.bf16 %v42, %v34
    %v67 = vpack.c.bf16 %v51, %v43
    %v68 = vpack.c.bf16 %v52, %v44
    %v69 = vpack.c.bf16 %v53, %v45
    %v70 = vpack.c.bf16 %v54, %v46
    %v71 = vpack.c.bf16 %v55, %v47
    %v72 = vpack.c.bf16 %v56, %v48
    %v73 = vpack.c.bf16 %v57, %v49
    %v74 = vpack.c.bf16 %v58, %v50
    %v75 = vld [vmem:[%s2] sm:$0xf]
    %v76 = vld [vmem:[%s2 + $0x4] sm:$0xf]
    %v77 = vld [vmem:[%s2 + $0x8] sm:$0xf]
    %v78 = vld [vmem:[%s2 + $0xc] sm:$0xf]
    %v79 = vld [vmem:[%s2 + $0x10] sm:$0xf]
    %v80 = vld [vmem:[%s2 + $0x14] sm:$0xf]
    %v81 = vld [vmem:[%s2 + $0x18] sm:$0xf]
    %v82 = vld [vmem:[%s2 + $0x1c] sm:$0xf]
    %v83 = vld [vmem:[%s2 + $0x20] sm:$0xf]
    %v84 = vld [vmem:[%s2 + $0x24] sm:$0xf]
    %v85 = vld [vmem:[%s2 + $0x28] sm:$0xf]
    %v86 = vld [vmem:[%s2 + $0x2c] sm:$0xf]
    %v87 = vld [vmem:[%s2 + $0x30] sm:$0xf]
    %v88 = vld [vmem:[%s2 + $0x34] sm:$0xf]
    %v89 = vld [vmem:[%s2 + $0x38] sm:$0xf]
    %v90 = vld [vmem:[%s2 + $0x3c] sm:$0xf]
    %v91 = vld [vmem:[%s2 + $0x40] sm:$0xf]
    %v92 = vld [vmem:[%s2 + $0x44] sm:$0xf]
    %v93 = vld [vmem:[%s2 + $0x48] sm:$0xf]
    %v94 = vld [vmem:[%s2 + $0x4c] sm:$0xf]
    %v95 = vld [vmem:[%s2 + $0x50] sm:$0xf]
    %v96 = vld [vmem:[%s2 + $0x54] sm:$0xf]
    %v97 = vld [vmem:[%s2 + $0x58] sm:$0xf]
    %v98 = vld [vmem:[%s2 + $0x5c] sm:$0xf]
    %v99 = vld [vmem:[%s2 + $0x60] sm:$0xf]
    %v100 = vld [vmem:[%s2 + $0x64] sm:$0xf]
    %v101 = vld [vmem:[%s2 + $0x68] sm:$0xf]
    %v102 = vld [vmem:[%s2 + $0x6c] sm:$0xf]
    %v103 = vld [vmem:[%s2 + $0x70] sm:$0xf]
    %v104 = vld [vmem:[%s2 + $0x74] sm:$0xf]
    %v105 = vld [vmem:[%s2 + $0x78] sm:$0xf]
    %v106 = vld [vmem:[%s2 + $0x7c] sm:$0xf]
    %v107 = vld [vmem:[%s2 + $0x80] sm:$0xf]
    %v108 = vld [vmem:[%s2 + $0x84] sm:$0xf]
    %v109 = vld [vmem:[%s2 + $0x88] sm:$0xf]
    %v110 = vld [vmem:[%s2 + $0x8c] sm:$0xf]
    %v111 = vld [vmem:[%s2 + $0x90] sm:$0xf]
    %v112 = vld [vmem:[%s2 + $0x94] sm:$0xf]
    %v113 = vld [vmem:[%s2 + $0x98] sm:$0xf]
    %v114 = vld [vmem:[%s2 + $0x9c] sm:$0xf]
    %v115 = vld [vmem:[%s2 + $0xa0] sm:$0xf]
    %v116 = vld [vmem:[%s2 + $0xa4] sm:$0xf]
    %v117 = vld [vmem:[%s2 + $0xa8] sm:$0xf]
    %v118 = vld [vmem:[%s2 + $0xac] sm:$0xf]
    %v119 = vld [vmem:[%s2 + $0xb0] sm:$0xf]
    %v120 = vld [vmem:[%s2 + $0xb4] sm:$0xf]
    %v121 = vld [vmem:[%s2 + $0xb8] sm:$0xf]
    %v122 = vld [vmem:[%s2 + $0xbc] sm:$0xf]
    %v123 = vld [vmem:[%s2 + $0xc0] sm:$0xf]
    %v124 = vld [vmem:[%s2 + $0xc4] sm:$0xf]
    %v125 = vld [vmem:[%s2 + $0xc8] sm:$0xf]
    %v126 = vld [vmem:[%s2 + $0xcc] sm:$0xf]
    %v127 = vld [vmem:[%s2 + $0xd0] sm:$0xf]
    %v128 = vld [vmem:[%s2 + $0xd4] sm:$0xf]
    %v129 = vld [vmem:[%s2 + $0xd8] sm:$0xf]
    %v130 = vld [vmem:[%s2 + $0xdc] sm:$0xf]
    %v131 = vld [vmem:[%s2 + $0xe0] sm:$0xf]
    %v132 = vld [vmem:[%s2 + $0xe4] sm:$0xf]
    %v133 = vld [vmem:[%s2 + $0xe8] sm:$0xf]
    %v134 = vld [vmem:[%s2 + $0xec] sm:$0xf]
    %v135 = vld [vmem:[%s2 + $0xf0] sm:$0xf]
    %v136 = vld [vmem:[%s2 + $0xf4] sm:$0xf]
    %v137 = vld [vmem:[%s2 + $0xf8] sm:$0xf]
    %v138 = vld [vmem:[%s2 + $0xfc] sm:$0xf]
    %v139 = vld [vmem:[%s2 + $0x100] sm:$0xf]
    %v140 = vld [vmem:[%s2 + $0x104] sm:$0xf]
    %v141 = vld [vmem:[%s2 + $0x108] sm:$0xf]
    %v142 = vld [vmem:[%s2 + $0x10c] sm:$0xf]
    %v143 = vld [vmem:[%s2 + $0x110] sm:$0xf]
    %v144 = vld [vmem:[%s2 + $0x114] sm:$0xf]
    %v145 = vld [vmem:[%s2 + $0x118] sm:$0xf]
    %v146 = vld [vmem:[%s2 + $0x11c] sm:$0xf]
    %v147 = vld [vmem:[%s2 + $0x120] sm:$0xf]
    %v148 = vld [vmem:[%s2 + $0x124] sm:$0xf]
    %v149 = vld [vmem:[%s2 + $0x128] sm:$0xf]
    %v150 = vld [vmem:[%s2 + $0x12c] sm:$0xf]
    %v151 = vld [vmem:[%s2 + $0x130] sm:$0xf]
    %v152 = vld [vmem:[%s2 + $0x134] sm:$0xf]
    %v153 = vld [vmem:[%s2 + $0x138] sm:$0xf]
    %v154 = vld [vmem:[%s2 + $0x13c] sm:$0xf]
    %v155 = vld [vmem:[%s2 + $0x140] sm:$0xf]
    %v156 = vld [vmem:[%s2 + $0x144] sm:$0xf]
    %v157 = vld [vmem:[%s2 + $0x148] sm:$0xf]
    %v158 = vld [vmem:[%s2 + $0x14c] sm:$0xf]
    %v159 = vld [vmem:[%s2 + $0x150] sm:$0xf]
    %v160 = vld [vmem:[%s2 + $0x154] sm:$0xf]
    %v161 = vld [vmem:[%s2 + $0x158] sm:$0xf]
    %v162 = vld [vmem:[%s2 + $0x15c] sm:$0xf]
    %v163 = vld [vmem:[%s2 + $0x160] sm:$0xf]
    %v164 = vld [vmem:[%s2 + $0x164] sm:$0xf]
    %v165 = vld [vmem:[%s2 + $0x168] sm:$0xf]
    %v166 = vld [vmem:[%s2 + $0x16c] sm:$0xf]
    %v167 = vld [vmem:[%s2 + $0x170] sm:$0xf]
    %v168 = vld [vmem:[%s2 + $0x174] sm:$0xf]
    %v169 = vld [vmem:[%s2 + $0x178] sm:$0xf]
    %v170 = vld [vmem:[%s2 + $0x17c] sm:$0xf]
    %v171 = vld [vmem:[%s2 + $0x180] sm:$0xf]
    %v172 = vld [vmem:[%s2 + $0x184] sm:$0xf]
    %v173 = vld [vmem:[%s2 + $0x188] sm:$0xf]
    %v174 = vld [vmem:[%s2 + $0x18c] sm:$0xf]
    %v175 = vld [vmem:[%s2 + $0x190] sm:$0xf]
    %v176 = vld [vmem:[%s2 + $0x194] sm:$0xf]
    %v177 = vld [vmem:[%s2 + $0x198] sm:$0xf]
    %v178 = vld [vmem:[%s2 + $0x19c] sm:$0xf]
    %v179 = vld [vmem:[%s2 + $0x1a0] sm:$0xf]
    %v180 = vld [vmem:[%s2 + $0x1a4] sm:$0xf]
    %v181 = vld [vmem:[%s2 + $0x1a8] sm:$0xf]
    %v182 = vld [vmem:[%s2 + $0x1ac] sm:$0xf]
    %v183 = vld [vmem:[%s2 + $0x1b0] sm:$0xf]
    %v184 = vld [vmem:[%s2 + $0x1b4] sm:$0xf]
    %v185 = vld [vmem:[%s2 + $0x1b8] sm:$0xf]
    %v186 = vld [vmem:[%s2 + $0x1bc] sm:$0xf]
    %v187 = vld [vmem:[%s2 + $0x1c0] sm:$0xf]
    %v188 = vld [vmem:[%s2 + $0x1c4] sm:$0xf]
    %v189 = vld [vmem:[%s2 + $0x1c8] sm:$0xf]
    %v190 = vld [vmem:[%s2 + $0x1cc] sm:$0xf]
    %v191 = vld [vmem:[%s2 + $0x1d0] sm:$0xf]
    %v192 = vld [vmem:[%s2 + $0x1d4] sm:$0xf]
    %v193 = vld [vmem:[%s2 + $0x1d8] sm:$0xf]
    %v194 = vld [vmem:[%s2 + $0x1dc] sm:$0xf]
    %v195 = vld [vmem:[%s2 + $0x1e0] sm:$0xf]
    %v196 = vld [vmem:[%s2 + $0x1e4] sm:$0xf]
    %v197 = vld [vmem:[%s2 + $0x1e8] sm:$0xf]
    %v198 = vld [vmem:[%s2 + $0x1ec] sm:$0xf]
    %v199 = vld [vmem:[%s2 + $0x1f0] sm:$0xf]
    %v200 = vld [vmem:[%s2 + $0x1f4] sm:$0xf]
    %v201 = vld [vmem:[%s2 + $0x1f8] sm:$0xf]
    %v202 = vld [vmem:[%s2 + $0x1fc] sm:$0xf]
    %v203 = vld [vmem:[%s3] sm:$0x1]
    %v205 = vlaneseq
    %v206 = vshrl.u32 %v205, 7
    %v207 = vsub.s32 0, %v206
    %v208 = vrot.slane %v203, %v207
    %v338 = vunpack.c.l.b16 %v75
    %v339 = vunpack.c.l.b16 %v76
    %v340 = vunpack.c.l.b16 %v77
    %v341 = vunpack.c.l.b16 %v78
    %v342 = vunpack.c.l.b16 %v79
    %v343 = vunpack.c.l.b16 %v80
    %v344 = vunpack.c.l.b16 %v81
    %v345 = vunpack.c.l.b16 %v82
    %v346 = vunpack.c.l.b16 %v83
    %v347 = vunpack.c.l.b16 %v84
    %v348 = vunpack.c.l.b16 %v85
    %v349 = vunpack.c.l.b16 %v86
    %v350 = vunpack.c.l.b16 %v87
    %v351 = vunpack.c.l.b16 %v88
    %v352 = vunpack.c.l.b16 %v89
    %v353 = vunpack.c.l.b16 %v90
    %v354 = vunpack.c.l.b16 %v91
    %v355 = vunpack.c.l.b16 %v92
    %v356 = vunpack.c.l.b16 %v93
    %v357 = vunpack.c.l.b16 %v94
    %v358 = vunpack.c.l.b16 %v95
    %v359 = vunpack.c.l.b16 %v96
    %v360 = vunpack.c.l.b16 %v97
    %v361 = vunpack.c.l.b16 %v98
    %v362 = vunpack.c.l.b16 %v99
    %v363 = vunpack.c.l.b16 %v100
    %v364 = vunpack.c.l.b16 %v101
    %v365 = vunpack.c.l.b16 %v102
    %v366 = vunpack.c.l.b16 %v103
    %v367 = vunpack.c.l.b16 %v104
    %v368 = vunpack.c.l.b16 %v105
    %v369 = vunpack.c.l.b16 %v106
    %v370 = vunpack.c.l.b16 %v107
    %v371 = vunpack.c.l.b16 %v108
    %v372 = vunpack.c.l.b16 %v109
    %v373 = vunpack.c.l.b16 %v110
    %v374 = vunpack.c.l.b16 %v111
    %v375 = vunpack.c.l.b16 %v112
    %v376 = vunpack.c.l.b16 %v113
    %v377 = vunpack.c.l.b16 %v114
    %v378 = vunpack.c.l.b16 %v115
    %v379 = vunpack.c.l.b16 %v116
    %v380 = vunpack.c.l.b16 %v117
    %v381 = vunpack.c.l.b16 %v118
    %v382 = vunpack.c.l.b16 %v119
    %v383 = vunpack.c.l.b16 %v120
    %v384 = vunpack.c.l.b16 %v121
    %v385 = vunpack.c.l.b16 %v122
    %v386 = vunpack.c.l.b16 %v123
    %v387 = vunpack.c.l.b16 %v124
    %v388 = vunpack.c.l.b16 %v125
    %v389 = vunpack.c.l.b16 %v126
    %v390 = vunpack.c.l.b16 %v127
    %v391 = vunpack.c.l.b16 %v128
    %v392 = vunpack.c.l.b16 %v129
    %v393 = vunpack.c.l.b16 %v130
    %v394 = vunpack.c.l.b16 %v131
    %v395 = vunpack.c.l.b16 %v132
    %v396 = vunpack.c.l.b16 %v133
    %v397 = vunpack.c.l.b16 %v134
    %v398 = vunpack.c.l.b16 %v135
    %v399 = vunpack.c.l.b16 %v136
    %v400 = vunpack.c.l.b16 %v137
    %v401 = vunpack.c.l.b16 %v138
    %v402 = vunpack.c.l.b16 %v139
    %v403 = vunpack.c.l.b16 %v140
    %v404 = vunpack.c.l.b16 %v141
    %v405 = vunpack.c.l.b16 %v142
    %v406 = vunpack.c.l.b16 %v143
    %v407 = vunpack.c.l.b16 %v144
    %v408 = vunpack.c.l.b16 %v145
    %v409 = vunpack.c.l.b16 %v146
    %v410 = vunpack.c.l.b16 %v147
    %v411 = vunpack.c.l.b16 %v148
    %v412 = vunpack.c.l.b16 %v149
    %v413 = vunpack.c.l.b16 %v150
    %v414 = vunpack.c.l.b16 %v151
    %v415 = vunpack.c.l.b16 %v152
    %v416 = vunpack.c.l.b16 %v153
    %v417 = vunpack.c.l.b16 %v154
    %v418 = vunpack.c.l.b16 %v155
    %v419 = vunpack.c.l.b16 %v156
    %v420 = vunpack.c.l.b16 %v157
    %v421 = vunpack.c.l.b16 %v158
    %v422 = vunpack.c.l.b16 %v159
    %v423 = vunpack.c.l.b16 %v160
    %v424 = vunpack.c.l.b16 %v161
    %v425 = vunpack.c.l.b16 %v162
    %v426 = vunpack.c.l.b16 %v163
    %v427 = vunpack.c.l.b16 %v164
    %v428 = vunpack.c.l.b16 %v165
    %v429 = vunpack.c.l.b16 %v166
    %v430 = vunpack.c.l.b16 %v167
    %v431 = vunpack.c.l.b16 %v168
    %v432 = vunpack.c.l.b16 %v169
    %v433 = vunpack.c.l.b16 %v170
    %v434 = vunpack.c.l.b16 %v171
    %v435 = vunpack.c.l.b16 %v172
    %v436 = vunpack.c.l.b16 %v173
    %v437 = vunpack.c.l.b16 %v174
    %v438 = vunpack.c.l.b16 %v175
    %v439 = vunpack.c.l.b16 %v176
    %v440 = vunpack.c.l.b16 %v177
    %v441 = vunpack.c.l.b16 %v178
    %v442 = vunpack.c.l.b16 %v179
    %v443 = vunpack.c.l.b16 %v180
    %v444 = vunpack.c.l.b16 %v181
    %v445 = vunpack.c.l.b16 %v182
    %v446 = vunpack.c.l.b16 %v183
    %v447 = vunpack.c.l.b16 %v184
    %v448 = vunpack.c.l.b16 %v185
    %v449 = vunpack.c.l.b16 %v186
    %v450 = vunpack.c.l.b16 %v187
    %v451 = vunpack.c.l.b16 %v188
    %v452 = vunpack.c.l.b16 %v189
    %v453 = vunpack.c.l.b16 %v190
    %v454 = vunpack.c.l.b16 %v191
    %v455 = vunpack.c.l.b16 %v192
    %v456 = vunpack.c.l.b16 %v193
    %v457 = vunpack.c.l.b16 %v194
    %v458 = vunpack.c.l.b16 %v195
    %v459 = vunpack.c.l.b16 %v196
    %v460 = vunpack.c.l.b16 %v197
    %v461 = vunpack.c.l.b16 %v198
    %v462 = vunpack.c.l.b16 %v199
    %v463 = vunpack.c.l.b16 %v200
    %v464 = vunpack.c.l.b16 %v201
    %v465 = vunpack.c.l.b16 %v202
    %v466 = vpack.c.b16 %v339, %v338
    %v467 = vpack.c.b16 %v341, %v340
    %v468 = vpack.c.b16 %v343, %v342
    %v469 = vpack.c.b16 %v345, %v344
    %v470 = vpack.c.b16 %v347, %v346
    %v471 = vpack.c.b16 %v349, %v348
    %v472 = vpack.c.b16 %v351, %v350
    %v473 = vpack.c.b16 %v353, %v352
    %v474 = vpack.c.b16 %v355, %v354
    %v475 = vpack.c.b16 %v357, %v356
    %v476 = vpack.c.b16 %v359, %v358
    %v477 = vpack.c.b16 %v361, %v360
    %v478 = vpack.c.b16 %v363, %v362
    %v479 = vpack.c.b16 %v365, %v364
    %v480 = vpack.c.b16 %v367, %v366
    %v481 = vpack.c.b16 %v369, %v368
    %v482 = vpack.c.b16 %v371, %v370
    %v483 = vpack.c.b16 %v373, %v372
    %v484 = vpack.c.b16 %v375, %v374
    %v485 = vpack.c.b16 %v377, %v376
    %v486 = vpack.c.b16 %v379, %v378
    %v487 = vpack.c.b16 %v381, %v380
    %v488 = vpack.c.b16 %v383, %v382
    %v489 = vpack.c.b16 %v385, %v384
    %v490 = vpack.c.b16 %v387, %v386
    %v491 = vpack.c.b16 %v389, %v388
    %v492 = vpack.c.b16 %v391, %v390
    %v493 = vpack.c.b16 %v393, %v392
    %v494 = vpack.c.b16 %v395, %v394
    %v495 = vpack.c.b16 %v397, %v396
    %v496 = vpack.c.b16 %v399, %v398
    %v497 = vpack.c.b16 %v401, %v400
    %v498 = vpack.c.b16 %v403, %v402
    %v499 = vpack.c.b16 %v405, %v404
    %v500 = vpack.c.b16 %v407, %v406
    %v501 = vpack.c.b16 %v409, %v408
    %v502 = vpack.c.b16 %v411, %v410
    %v503 = vpack.c.b16 %v413, %v412
    %v504 = vpack.c.b16 %v415, %v414
    %v505 = vpack.c.b16 %v417, %v416
    %v506 = vpack.c.b16 %v419, %v418
    %v507 = vpack.c.b16 %v421, %v420
    %v508 = vpack.c.b16 %v423, %v422
    %v509 = vpack.c.b16 %v425, %v424
    %v510 = vpack.c.b16 %v427, %v426
    %v511 = vpack.c.b16 %v429, %v428
    %v512 = vpack.c.b16 %v431, %v430
    %v513 = vpack.c.b16 %v433, %v432
    %v514 = vpack.c.b16 %v435, %v434
    %v515 = vpack.c.b16 %v437, %v436
    %v516 = vpack.c.b16 %v439, %v438
    %v517 = vpack.c.b16 %v441, %v440
    %v518 = vpack.c.b16 %v443, %v442
    %v519 = vpack.c.b16 %v445, %v444
    %v520 = vpack.c.b16 %v447, %v446
    %v521 = vpack.c.b16 %v449, %v448
    %v522 = vpack.c.b16 %v451, %v450
    %v523 = vpack.c.b16 %v453, %v452
    %v524 = vpack.c.b16 %v455, %v454
    %v525 = vpack.c.b16 %v457, %v456
    %v526 = vpack.c.b16 %v459, %v458
    %v527 = vpack.c.b16 %v461, %v460
    %v528 = vpack.c.b16 %v463, %v462
    %v529 = vpack.c.b16 %v465, %v464
    %594 = vmatprep.subr.bf16.mxu0 0
    %595 = vmatpush1.bf16.msra.mxu0 %v466
    %596 = vmatprep.subr.bf16.mxu0 0
    %597 = vmatpush1.bf16.msra.mxu0 %v467
    %598 = vmatprep.subr.bf16.mxu0 0
    %599 = vmatpush1.bf16.msra.mxu0 %v468
    %600 = vmatprep.subr.bf16.mxu0 0
    %601 = vmatpush1.bf16.msra.mxu0 %v469
    %602 = vmatprep.subr.bf16.mxu0 0
    %603 = vmatpush1.bf16.msra.mxu0 %v470
    %604 = vmatprep.subr.bf16.mxu0 0
    %605 = vmatpush1.bf16.msra.mxu0 %v471
    %606 = vmatprep.subr.bf16.mxu0 0
    %607 = vmatpush1.bf16.msra.mxu0 %v472
    %608 = vmatprep.subr.bf16.mxu0 0
    %609 = vmatpush1.bf16.msra.mxu0 %v473
    %610 = vmatprep.subr.bf16.mxu0 0
    %611 = vmatpush1.bf16.msra.mxu0 %v474
    %612 = vmatprep.subr.bf16.mxu0 0
    %613 = vmatpush1.bf16.msra.mxu0 %v475
    %614 = vmatprep.subr.bf16.mxu0 0
    %615 = vmatpush1.bf16.msra.mxu0 %v476
    %616 = vmatprep.subr.bf16.mxu0 0
    %617 = vmatpush1.bf16.msra.mxu0 %v477
    %618 = vmatprep.subr.bf16.mxu0 0
    %619 = vmatpush1.bf16.msra.mxu0 %v478
    %620 = vmatprep.subr.bf16.mxu0 0
    %621 = vmatpush1.bf16.msra.mxu0 %v479
    %622 = vmatprep.subr.bf16.mxu0 0
    %623 = vmatpush1.bf16.msra.mxu0 %v480
    %624 = vmatprep.subr.bf16.mxu0 0
    %625 = vmatpush1.bf16.msra.mxu0 %v481
    %626 = vmatprep.mubr.bf16.mxu0 %v60
    %627 = vmatmul.mubr.bf16.gmra.mrb[0].mxu0 %v59
    %v628 = vpop.f32.mrb[0].mxu0
    %v629 = vadd.f32 %v208, %v628
    %v630 = vpop.f32.mrb[0].mxu0
    %v631 = vpop.f32.mrb[0].mxu0
    %v632 = vadd.f32 %v208, %v631
    %v633 = vpop.f32.mrb[0].mxu0
    %634 = vmatprep.mubr.bf16.mxu0 %v68
    %635 = vmatmul.mubr.bf16.gmra.mrb[0].mxu0 %v67
    %v636 = vpop.f32.mrb[0].mxu0
    %v637 = vadd.f32 %v208, %v636
    %v638 = vpop.f32.mrb[0].mxu0
    %v639 = vpop.f32.mrb[0].mxu0
    %v640 = vadd.f32 %v208, %v639
    %v641 = vpop.f32.mrb[0].mxu0
    %642 = vdwg.mxu0
    %643 = vmatprep.subr.bf16.mxu0 0
    %644 = vmatpush1.bf16.msra.mxu0 %v482
    %645 = vmatprep.subr.bf16.mxu0 0
    %646 = vmatpush1.bf16.msra.mxu0 %v483
    %647 = vmatprep.subr.bf16.mxu0 0
    %648 = vmatpush1.bf16.msra.mxu0 %v484
    %649 = vmatprep.subr.bf16.mxu0 0
    %650 = vmatpush1.bf16.msra.mxu0 %v485
    %651 = vmatprep.subr.bf16.mxu0 0
    %652 = vmatpush1.bf16.msra.mxu0 %v486
    %653 = vmatprep.subr.bf16.mxu0 0
    %654 = vmatpush1.bf16.msra.mxu0 %v487
    %655 = vmatprep.subr.bf16.mxu0 0
    %656 = vmatpush1.bf16.msra.mxu0 %v488
    %657 = vmatprep.subr.bf16.mxu0 0
    %658 = vmatpush1.bf16.msra.mxu0 %v489
    %659 = vmatprep.subr.bf16.mxu0 0
    %660 = vmatpush1.bf16.msra.mxu0 %v490
    %661 = vmatprep.subr.bf16.mxu0 0
    %662 = vmatpush1.bf16.msra.mxu0 %v491
    %663 = vmatprep.subr.bf16.mxu0 0
    %664 = vmatpush1.bf16.msra.mxu0 %v492
    %665 = vmatprep.subr.bf16.mxu0 0
    %666 = vmatpush1.bf16.msra.mxu0 %v493
    %667 = vmatprep.subr.bf16.mxu0 0
    %668 = vmatpush1.bf16.msra.mxu0 %v494
    %669 = vmatprep.subr.bf16.mxu0 0
    %670 = vmatpush1.bf16.msra.mxu0 %v495
    %671 = vmatprep.subr.bf16.mxu0 0
    %672 = vmatpush1.bf16.msra.mxu0 %v496
    %673 = vmatprep.subr.bf16.mxu0 0
    %674 = vmatpush1.bf16.msra.mxu0 %v497
    %675 = vmatprep.mubr.bf16.mxu0 %v62
    %676 = vmatmul.mubr.bf16.gmra.mrb[0].mxu0 %v61
    %v677 = vpop.f32.mrb[0].mxu0
    %v678 = vadd.f32 %v629, %v677
    %v679 = vpop.f32.mrb[0].mxu0
    %v680 = vpop.f32.mrb[0].mxu0
    %v681 = vadd.f32 %v632, %v680
    %v682 = vpop.f32.mrb[0].mxu0
    %683 = vmatprep.mubr.bf16.mxu0 %v70
    %684 = vmatmul.mubr.bf16.gmra.mrb[0].mxu0 %v69
    %v685 = vpop.f32.mrb[0].mxu0
    %v686 = vadd.f32 %v637, %v685
    %v687 = vpop.f32.mrb[0].mxu0
    %v688 = vpop.f32.mrb[0].mxu0
    %v689 = vadd.f32 %v640, %v688
    %v690 = vpop.f32.mrb[0].mxu0
    %691 = vdwg.mxu0
    %692 = vmatprep.subr.bf16.mxu0 0
    %693 = vmatpush1.bf16.msra.mxu0 %v498
    %694 = vmatprep.subr.bf16.mxu0 0
    %695 = vmatpush1.bf16.msra.mxu0 %v499
    %696 = vmatprep.subr.bf16.mxu0 0
    %697 = vmatpush1.bf16.msra.mxu0 %v500
    %698 = vmatprep.subr.bf16.mxu0 0
    %699 = vmatpush1.bf16.msra.mxu0 %v501
    %700 = vmatprep.subr.bf16.mxu0 0
    %701 = vmatpush1.bf16.msra.mxu0 %v502
    %702 = vmatprep.subr.bf16.mxu0 0
    %703 = vmatpush1.bf16.msra.mxu0 %v503
    %704 = vmatprep.subr.bf16.mxu0 0
    %705 = vmatpush1.bf16.msra.mxu0 %v504
    %706 = vmatprep.subr.bf16.mxu0 0
    %707 = vmatpush1.bf16.msra.mxu0 %v505
    %708 = vmatprep.subr.bf16.mxu0 0
    %709 = vmatpush1.bf16.msra.mxu0 %v506
    %710 = vmatprep.subr.bf16.mxu0 0
    %711 = vmatpush1.bf16.msra.mxu0 %v507
    %712 = vmatprep.subr.bf16.mxu0 0
    %713 = vmatpush1.bf16.msra.mxu0 %v508
    %714 = vmatprep.subr.bf16.mxu0 0
    %715 = vmatpush1.bf16.msra.mxu0 %v509
    %716 = vmatprep.subr.bf16.mxu0 0
    %717 = vmatpush1.bf16.msra.mxu0 %v510
    %718 = vmatprep.subr.bf16.mxu0 0
    %719 = vmatpush1.bf16.msra.mxu0 %v511
    %720 = vmatprep.subr.bf16.mxu0 0
    %721 = vmatpush1.bf16.msra.mxu0 %v512
    %722 = vmatprep.subr.bf16.mxu0 0
    %723 = vmatpush1.bf16.msra.mxu0 %v513
    %724 = vmatprep.mubr.bf16.mxu0 %v64
    %725 = vmatmul.mubr.bf16.gmra.mrb[0].mxu0 %v63
    %v726 = vpop.f32.mrb[0].mxu0
    %v727 = vadd.f32 %v678, %v726
    %v728 = vpop.f32.mrb[0].mxu0
    %v729 = vpop.f32.mrb[0].mxu0
    %v730 = vadd.f32 %v681, %v729
    %v731 = vpop.f32.mrb[0].mxu0
    %732 = vmatprep.mubr.bf16.mxu0 %v72
    %733 = vmatmul.mubr.bf16.gmra.mrb[0].mxu0 %v71
    %v734 = vpop.f32.mrb[0].mxu0
    %v735 = vadd.f32 %v686, %v734
    %v736 = vpop.f32.mrb[0].mxu0
    %v737 = vpop.f32.mrb[0].mxu0
    %v738 = vadd.f32 %v689, %v737
    %v739 = vpop.f32.mrb[0].mxu0
    %740 = vdwg.mxu0
    %741 = vmatprep.subr.bf16.mxu0 0
    %742 = vmatpush1.bf16.msra.mxu0 %v514
    %743 = vmatprep.subr.bf16.mxu0 0
    %744 = vmatpush1.bf16.msra.mxu0 %v515
    %745 = vmatprep.subr.bf16.mxu0 0
    %746 = vmatpush1.bf16.msra.mxu0 %v516
    %747 = vmatprep.subr.bf16.mxu0 0
    %748 = vmatpush1.bf16.msra.mxu0 %v517
    %749 = vmatprep.subr.bf16.mxu0 0
    %750 = vmatpush1.bf16.msra.mxu0 %v518
    %751 = vmatprep.subr.bf16.mxu0 0
    %752 = vmatpush1.bf16.msra.mxu0 %v519
    %753 = vmatprep.subr.bf16.mxu0 0
    %754 = vmatpush1.bf16.msra.mxu0 %v520
    %755 = vmatprep.subr.bf16.mxu0 0
    %756 = vmatpush1.bf16.msra.mxu0 %v521
    %757 = vmatprep.subr.bf16.mxu0 0
    %758 = vmatpush1.bf16.msra.mxu0 %v522
    %759 = vmatprep.subr.bf16.mxu0 0
    %760 = vmatpush1.bf16.msra.mxu0 %v523
    %761 = vmatprep.subr.bf16.mxu0 0
    %762 = vmatpush1.bf16.msra.mxu0 %v524
    %763 = vmatprep.subr.bf16.mxu0 0
    %764 = vmatpush1.bf16.msra.mxu0 %v525
    %765 = vmatprep.subr.bf16.mxu0 0
    %766 = vmatpush1.bf16.msra.mxu0 %v526
    %767 = vmatprep.subr.bf16.mxu0 0
    %768 = vmatpush1.bf16.msra.mxu0 %v527
    %769 = vmatprep.subr.bf16.mxu0 0
    %770 = vmatpush1.bf16.msra.mxu0 %v528
    %771 = vmatprep.subr.bf16.mxu0 0
    %772 = vmatpush1.bf16.msra.mxu0 %v529
    %773 = vmatprep.mubr.bf16.mxu0 %v66
    %774 = vmatmul.mubr.bf16.gmra.mrb[0].mxu0 %v65
    %v775 = vpop.f32.mrb[0].mxu0
    %v776 = vadd.f32 %v727, %v775
    %v777 = vpop.f32.mrb[0].mxu0
    %v778 = vpop.f32.mrb[0].mxu0
    %v779 = vadd.f32 %v730, %v778
    %v780 = vpop.f32.mrb[0].mxu0
    %781 = vmatprep.mubr.bf16.mxu0 %v74
    %782 = vmatmul.mubr.bf16.gmra.mrb[0].mxu0 %v73
    %v783 = vpop.f32.mrb[0].mxu0
    %v784 = vadd.f32 %v735, %v783
    %v785 = vpop.f32.mrb[0].mxu0
    %v786 = vpop.f32.mrb[0].mxu0
    %v787 = vadd.f32 %v738, %v786
    %v788 = vpop.f32.mrb[0].mxu0
    %789 = vdwg.mxu0
    %v790 = vld [vmem:[%s1] sm:$0x3]
    %v791 = vpack.c.bf16 %v790, %v790
    %v792 = vld [vmem:[%s4] sm:$0xf]
    %v793 = vld [vmem:[%s4 + $0x4] sm:$0xf]
    %v794 = vld [vmem:[%s4 + $0x8] sm:$0xf]
    %v795 = vld [vmem:[%s4 + $0xc] sm:$0xf]
    %v796 = vld [vmem:[%s4 + $0x10] sm:$0xf]
    %v797 = vld [vmem:[%s4 + $0x14] sm:$0xf]
    %v798 = vld [vmem:[%s4 + $0x18] sm:$0xf]
    %v799 = vld [vmem:[%s4 + $0x1c] sm:$0xf]
    %v800 = vld [vmem:[%s4 + $0x20] sm:$0xf]
    %v801 = vld [vmem:[%s4 + $0x24] sm:$0xf]
    %v802 = vld [vmem:[%s4 + $0x28] sm:$0xf]
    %v803 = vld [vmem:[%s4 + $0x2c] sm:$0xf]
    %v804 = vld [vmem:[%s4 + $0x30] sm:$0xf]
    %v805 = vld [vmem:[%s4 + $0x34] sm:$0xf]
    %v806 = vld [vmem:[%s4 + $0x38] sm:$0xf]
    %v807 = vld [vmem:[%s4 + $0x3c] sm:$0xf]
    %v808 = vld [vmem:[%s5] sm:$0x1]
    %v810 = vlaneseq
    %v811 = vshrl.u32 %v810, 7
    %v812 = vsub.s32 0, %v811
    %v813 = vrot.slane %v808, %v812
    %v831 = vunpack.c.l.b16 %v792
    %v832 = vunpack.c.l.b16 %v793
    %v833 = vunpack.c.l.b16 %v794
    %v834 = vunpack.c.l.b16 %v795
    %v835 = vunpack.c.l.b16 %v796
    %v836 = vunpack.c.l.b16 %v797
    %v837 = vunpack.c.l.b16 %v798
    %v838 = vunpack.c.l.b16 %v799
    %v839 = vunpack.c.l.b16 %v800
    %v840 = vunpack.c.l.b16 %v801
    %v841 = vunpack.c.l.b16 %v802
    %v842 = vunpack.c.l.b16 %v803
    %v843 = vunpack.c.l.b16 %v804
    %v844 = vunpack.c.l.b16 %v805
    %v845 = vunpack.c.l.b16 %v806
    %v846 = vunpack.c.l.b16 %v807
    %v847 = vpack.c.b16 %v832, %v831
    %v848 = vpack.c.b16 %v834, %v833
    %v849 = vpack.c.b16 %v836, %v835
    %v850 = vpack.c.b16 %v838, %v837
    %v851 = vpack.c.b16 %v840, %v839
    %v852 = vpack.c.b16 %v842, %v841
    %v853 = vpack.c.b16 %v844, %v843
    %v854 = vpack.c.b16 %v846, %v845
    %863 = vmatprep.subr.bf16.mxu0 0
    %864 = vmatpush1.bf16.msra.mxu0 %v847
    %865 = vmatprep.subr.bf16.mxu0 0
    %866 = vmatpush1.bf16.msra.mxu0 %v848
    %867 = vmatprep.subr.bf16.mxu0 0
    %868 = vmatpush1.bf16.msra.mxu0 %v849
    %869 = vmatprep.subr.bf16.mxu0 0
    %870 = vmatpush1.bf16.msra.mxu0 %v850
    %871 = vmatprep.subr.bf16.mxu0 0
    %872 = vmatpush1.bf16.msra.mxu0 %v851
    %873 = vmatprep.subr.bf16.mxu0 0
    %874 = vmatpush1.bf16.msra.mxu0 %v852
    %875 = vmatprep.subr.bf16.mxu0 0
    %876 = vmatpush1.bf16.msra.mxu0 %v853
    %877 = vmatprep.subr.bf16.mxu0 0
    %878 = vmatpush1.bf16.msra.mxu0 %v854
    %879 = vmatprep.subr.bf16.mxu0 0
    %880 = vmatpush1.bf16.msra.mxu0 0
    %881 = vmatprep.subr.bf16.mxu0 0
    %882 = vmatpush1.bf16.msra.mxu0 0
    %883 = vmatprep.subr.bf16.mxu0 0
    %884 = vmatpush1.bf16.msra.mxu0 0
    %885 = vmatprep.subr.bf16.mxu0 0
    %886 = vmatpush1.bf16.msra.mxu0 0
    %887 = vmatprep.subr.bf16.mxu0 0
    %888 = vmatpush1.bf16.msra.mxu0 0
    %889 = vmatprep.subr.bf16.mxu0 0
    %890 = vmatpush1.bf16.msra.mxu0 0
    %891 = vmatprep.subr.bf16.mxu0 0
    %892 = vmatpush1.bf16.msra.mxu0 0
    %893 = vmatprep.subr.bf16.mxu0 0
    %894 = vmatpush1.bf16.msra.mxu0 0
    %895 = vmatprep.mubr.bf16.mxu0 0
    %896 = vmatmul.mubr.bf16.gmra.mrb[0].mxu0 %v791
    %v897 = vpop.f32.mrb[0].mxu0
    %v898 = vadd.f32 %v813, %v897
    %v899 = vpop.f32.mrb[0].mxu0
    %v900 = vpop.f32.mrb[0].mxu0
    %v901 = vpop.f32.mrb[0].mxu0
    %902 = vdwg.mxu0
    %v903 = vmul.f32 %v776, %v776
    %v904 = vmul.f32 %v779, %v779
    %v905 = vmul.f32 %v784, %v784
    %v906 = vmul.f32 %v787, %v787
    %907 = vadd.xlane.f32.xlu0 %v903
    %v908 = vpop.xlane.xlu0 %907
    %909 = vadd.xlane.f32.xlu0 %v904
    %v910 = vpop.xlane.xlu0 %909
    %911 = vadd.xlane.f32.xlu0 %v905
    %v912 = vpop.xlane.xlu0 %911
    %913 = vadd.xlane.f32.xlu0 %v906
    %v914 = vpop.xlane.xlu0 %913
    %v915 = vadd.f32 %v908, 1e-12
    %v916 = vadd.f32 %v910, 1e-12
    %v917 = vadd.f32 %v912, 1e-12
    %v918 = vadd.f32 %v914, 1e-12
    %v919 = vrsqrt.pop %v915
    %v920 = vrsqrt.pop %v916
    %v921 = vrsqrt.pop %v917
    %v922 = vrsqrt.pop %v918
    %v923 = vmul.f32 %v776, %v919
    %v924 = vmul.f32 %v779, %v920
    %v925 = vmul.f32 %v784, %v921
    %v926 = vmul.f32 %v787, %v922
    %v927 = vmul.f32 %v898, %v898
    %vm928 = vcmask 1041408
    %v929 = vsel %vm928, %v927, 0.0
    %930 = vadd.xlane.f32.xlu0 %v929
    %v931 = vpop.xlane.xlu0 %930
    %v932 = vadd.f32 %v931, 1e-12
    %v933 = vrsqrt.pop %v932
    %v934 = vmul.f32 %v898, %v933
    %v937 = vunpack.c.l.s4 1966171168
    %v938 = vunpack.c.0.s8 %v937
    %v939 = vlaneseq
    %v940 = vshrl.u32 %v939, 7
    %v941 = vsub.s32 %v938, %v940
    %v942 = vrot.slane %v934, %v941
    %v943 = vcombine.high %v942, %v942
    %v945 = vunpack.c.l.s4 1966171168
    %v946 = vunpack.c.0.s8 %v945
    %v947 = vlaneseq
    %v948 = vshrl.u32 %v947, 7
    %v949 = vsub.s32 %v946, %v948
    %v950 = vrot.slane %v942, %v949
    %v952 = vunpack.c.l.s4 1966171168
    %v953 = vunpack.c.0.s8 %v952
    %v954 = vlaneseq
    %v955 = vshrl.u32 %v954, 7
    %v956 = vsub.s32 %v953, %v955
    %v957 = vrot.slane %v943, %v956
    %v958 = vlaneseq
    %v959 = vshrl.u32 %v958, 7
    %v960 = vsub.s32 0, %v959
    %v961 = vrot.slane %v950, %v960
    %v962 = vlaneseq
    %v963 = vshrl.u32 %v962, 7
    %v964 = vsub.s32 0, %v963
    %v965 = vrot.slane %v957, %v964
    %v968 = vmul.f32 %v923, %v961
    %v969 = vmul.f32 %v924, %v961
    %v970 = vmul.f32 %v925, %v965
    %v971 = vmul.f32 %v926, %v965
    %972 = vadd.xlane.f32.xlu0 %v968
    %v973 = vpop.xlane.xlu0 %972
    %974 = vadd.xlane.f32.xlu0 %v969
    %v975 = vpop.xlane.xlu0 %974
    %976 = vadd.xlane.f32.xlu0 %v970
    %v977 = vpop.xlane.xlu0 %976
    %978 = vadd.xlane.f32.xlu0 %v971
    %v979 = vpop.xlane.xlu0 %978
    %v980 = vlaneseq
    %v981 = vand.u32 %v980, 127
    %v986 = vlaneseq
    %v987 = vshrl.u32 %v986, 7
    %v988 = vsub.s32 %v981, %v987
    %v989 = vrot.slane %v973, %v988
    %v990 = vadd.s32 %v981, 4294967288
    %v991 = vlaneseq
    %v992 = vshrl.u32 %v991, 7
    %v993 = vsub.s32 %v990, %v992
    %v994 = vrot.slane %v975, %v993
    %vm995 = vcmask 130112
    %v996 = vsel %vm995, %v994, %v989
    %v997 = vlaneseq
    %v998 = vshrl.u32 %v997, 7
    %v999 = vsub.s32 %v981, %v998
    %v1000 = vrot.slane %v977, %v999
    %v1001 = vlaneseq
    %v1002 = vshrl.u32 %v1001, 7
    %v1003 = vsub.s32 %v990, %v1002
    %v1004 = vrot.slane %v979, %v1003
    %v1005 = vsel %vm995, %v1004, %v1000
    %vm1006 = vcmask 1041409
    %v1007 = vsel %vm1006, %v1005, %v996
    %vm1009 = vcmask 123904
    %v1010 = vsel %vm1009, %v1007, -inf
    %1011 = vmax.xlane.f32.xlu0 %v1010
    %v1012 = vpop.xlane.xlu0 %1011
    %v1014 = vlaneseq
    %v1015 = vshrl.u32 %v1014, 7
    %v1016 = vsub.s32 0, %v1015
    %v1017 = vrot.slane %v1012, %v1016
    %v1018 = vlaneseq
    %v1019 = vshrl.u32 %v1018, 7
    %v1020 = vsub.s32 1, %v1019
    %v1021 = vrot.slane %v1012, %v1020
    %vm1024 = vcmp.ge.f32.partialorder %v973, %v1017
    %vm1025 = vcmp.ge.f32.partialorder %v975, %v1017
    %vm1026 = vcmp.ge.f32.partialorder %v977, %v1021
    %vm1027 = vcmp.ge.f32.partialorder %v979, %v1021
    %1029 = vbcast.lane.b32.xlu0 %v981, 256
    %v1030 = vpop.permute.xlu0 %1029
    %s1032 = sor.u32 256, 8
    %1033 = vbcast.lane.b32.xlu0 %v981, %s1032
    %v1034 = vpop.permute.xlu0 %1033
    %v1035 = vsel %vm1024, %v1030, 16
    %v1036 = vsel %vm1025, %v1034, 16
    %v1037 = vsel %vm1026, %v1030, 16
    %v1038 = vsel %vm1027, %v1034, 16
    %1039 = vset.pattern.permute.xlu0 0
    %1040 = vperm.xlu0 %1039, %v1035
    %v1041 = vpop.permute.xlu0 %1040
    %1042 = vset.pattern.permute.xlu0 0
    %1043 = vperm.xlu0 %1042, %v1036
    %v1044 = vpop.permute.xlu0 %1043
    %1045 = vset.pattern.permute.xlu0 0
    %1046 = vperm.xlu0 %1045, %v1037
    %v1047 = vpop.permute.xlu0 %1046
    %1048 = vset.pattern.permute.xlu0 0
    %1049 = vperm.xlu0 %1048, %v1038
    %v1050 = vpop.permute.xlu0 %1049
    %v1051 = vlaneseq
    %v1052 = vshrl.u32 %v1051, 7
    %v1053 = vsub.s32 %v981, %v1052
    %v1054 = vrot.slane %v1041, %v1053
    %v1055 = vlaneseq
    %v1056 = vshrl.u32 %v1055, 7
    %v1057 = vsub.s32 %v990, %v1056
    %v1058 = vrot.slane %v1044, %v1057
    %v1059 = vsel %vm995, %v1058, %v1054
    %v1060 = vlaneseq
    %v1061 = vshrl.u32 %v1060, 7
    %v1062 = vsub.s32 %v981, %v1061
    %v1063 = vrot.slane %v1047, %v1062
    %v1064 = vlaneseq
    %v1065 = vshrl.u32 %v1064, 7
    %v1066 = vsub.s32 %v990, %v1065
    %v1067 = vrot.slane %v1050, %v1066
    %v1068 = vsel %vm995, %v1067, %v1063
    %v1069 = vsel %vm1006, %v1068, %v1059
    %v1070 = vsel %vm1009, %v1069, 2147483647
    %v1071 = vand.u32 %v1070, 65535
    %v1072 = vshra.s32 %v1070, 16
    %v1073 = vcvt.s32.f32 %v1071
    %v1074 = vcvt.s32.f32 %v1072
    %1075 = vmin.xlane.f32.xlu0 %v1074
    %v1076 = vpop.xlane.xlu0 %1075
    %vm1077 = vcmp.eq.f32.partialorder %v1074, %v1076
    %v1078 = vsel %vm1077, %v1073, inf
    %1079 = vmin.xlane.f32.xlu0 %v1078
    %v1080 = vpop.xlane.xlu0 %1079
    %v1081 = vcvt.f32.s32 %v1080
    %v1082 = vcvt.f32.s32 %v1076
    %v1083 = vshll.u32 %v1082, 16
    %v1084 = vadd.s32 %v1083, %v1081
    %1085 = vst.msk [vmem:[#allocation2] sm:$0x3] %vm1009, %v1007
    %vm1086 = vcmp.eq.s32.totalorder %v981, %v1084
    %v1087 = vsel %vm1086, 1, 0
    %1088 = vst.msk [vmem:[%s7] sm:$0x3] %vm1009, %v1087
    // Predicated region
    $region26: #{_lambda_.3} parent=1 // pred_check
      _
    $region27: #{_lambda_.3} parent=1 // pred_check_branch
      %1090 = sbr.rel (0) target = $region29
    $region28: #{_lambda_.3} parent=1 // pred_region
      %s1092 = ssub.s32 32, 32
      %1093 = vsyncadd [#allocation3], %s1092
      %s1095 = sshll.u32 [#allocation2], 4
      %s1096 = int_to_ptr.vmem [resolvable:$true] %s1095
      %1098 = dma.vmem_to_hbm [thread:$0]  %s1096, 32, %s6, [#allocation3]
    $region29: #{_lambda_.3} parent=1 // pred_fallthru
      _
    // Predicated region
    $region30: #{_lambda_.3} parent=1 // pred_check
      _
    $region31: #{_lambda_.3} parent=1 // pred_check_branch
      %1100 = sbr.rel (0) target = $region33
    $region32: #{_lambda_.3} parent=1 // pred_region
      _
    $region33: #{_lambda_.3} parent=1 // pred_fallthru
      _
    // Predicated region
    $region34: #{_lambda_.3} parent=1 // pred_check
      _
    $region35: #{_lambda_.3} parent=1 // pred_check_branch
      %1102 = sbr.rel (0) target = $region37
    $region36: #{_lambda_.3} parent=1 // pred_region
      %1103 = dma.done [#allocation3], 32
    $region37: #{_lambda_.3} parent=1 // pred_fallthru
      _
    // Predicated region
    $region38: #{_lambda_.3} parent=1 // pred_check
      _
    $region39: #{_lambda_.3} parent=1 // pred_check_branch
      %1105 = sbr.rel (0) target = $region41
    $region40: #{_lambda_.3} parent=1 // pred_region
      _
    $region41: #{_lambda_.3} parent=1 // pred_fallthru
      _
    %1106 = vsyncpa [#allocation3], 1

</llo_original>
